<compile_context>
chip_gen: v6e
topology: v6e:2x2x1
jax: 0.10.0
libtpu: 0.0.40
codegen_flags: <defaults>
</compile_context>

<pallas_src>
import jax
import jax.numpy as jnp
from jax.experimental import pallas as pl
from jax.experimental.pallas import tpu as pltpu

F_IN, H1, H2, H3, F_OUT = 305, 200, 100, 50, 1
F_PAD = 384  # 305 rounded up to a multiple of 128 (lane width)


def fnn_kernel(xT_ref,
               w1T_ref, b1_ref,
               w2T_ref, b2_ref,
               w3T_ref, b3_ref,
               w4_ref, b4_ref,
               out_ref):
    # Compute dtype for MXU inputs (bf16 in the fast path, f32 in the exact path);
    # accumulation is always f32 via preferred_element_type.
    cdt = w1T_ref.dtype

    xT = xT_ref[...]                                              # (F_PAD, tb), cdt

    h = jnp.dot(w1T_ref[...], xT,
                preferred_element_type=jnp.float32) + b1_ref[...]  # (200, tb) f32
    h = jnp.maximum(h, 0.0)

    h = jnp.dot(w2T_ref[...], h.astype(cdt),
                preferred_element_type=jnp.float32) + b2_ref[...]  # (100, tb) f32
    h = jnp.maximum(h, 0.0)

    h = jnp.dot(w3T_ref[...], h.astype(cdt),
                preferred_element_type=jnp.float32) + b3_ref[...]  # (50, tb) f32
    h = jnp.maximum(h, 0.0)

    # Final layer has a single output feature: VPU multiply + sublane (XLU) reduce,
    # producing a lane-dense (1, tb) row instead of a masked (tb, 1) column.
    out = jnp.sum(h * w4_ref[...], axis=0, keepdims=True) + b4_ref[...]  # (1, tb) f32
    out_ref[...] = out.astype(out_ref.dtype)


def _round_up(n, m):
    return ((n + m - 1) // m) * m


def _choose_tile_b(B, tile_b):
    # Lane-dense x / output blocks need tb to be a multiple of 128.
    tb = min(_round_up(tile_b, 128), _round_up(B, 128))
    # Prefer >= 2 grid steps so the "parallel" batch axis can split across v7x's
    # two TensorCores (no-op on v5e/v6e; impossible below 128 rows).
    if tb > 128 and _round_up(B, tb) // tb < 2:
        tb = _round_up(pl.cdiv(B, 2), 128)
    return tb


def fnn_forward(x, params, *, tile_b=2048, precision="bf16"):
    """x: (B, 305) float32. params: w1..w4 stored as (in, out), b1..b4 as (1, out).

    precision: "bf16" (MXU inputs in bf16, f32 accumulation -- fast path) or
               "f32" (full-precision matmuls).
    """
    B = x.shape[0]
    cdt = jnp.bfloat16 if precision == "bf16" else jnp.float32
    itemsize = jnp.dtype(cdt).itemsize

    tb = _choose_tile_b(B, tile_b)
    B_pad = _round_up(B, tb)

    # Feature-major x, zero-padded to (F_PAD, B_pad): padding is exact (zeros).
    xT = jnp.pad(x.T.astype(cdt), ((0, F_PAD - F_IN), (0, B_pad - B)))

    # Weights in (out, in) layout for the transposed formulation; layer-1 input dim
    # zero-padded to F_PAD.  Biases stay f32 (added to the f32 accumulators).
    w1T = jnp.pad(params["w1"].T.astype(cdt), ((0, 0), (0, F_PAD - F_IN)))  # (200, 384)
    w2T = params["w2"].T.astype(cdt)                                        # (100, 200)
    w3T = params["w3"].T.astype(cdt)                                        # (50, 100)
    w4 = params["w4"].astype(jnp.float32)                                   # (50, 1)
    b1 = params["b1"].reshape(H1, 1).astype(jnp.float32)
    b2 = params["b2"].reshape(H2, 1).astype(jnp.float32)
    b3 = params["b3"].reshape(H3, 1).astype(jnp.float32)
    b4 = params["b4"].reshape(1, 1).astype(jnp.float32)

    grid = (B_pad // tb,)

    # Weights/biases: full-extent blocks with a constant index_map -> VMEM-resident,
    # no per-step re-DMA.  Only the x tiles (and the small output rows) are pipelined.
    def resident(a):
        return pl.BlockSpec(a.shape, lambda i: (0,) * a.ndim)

    flops = 2 * B_pad * (F_PAD * H1 + H1 * H2 + H2 * H3 + H3 * F_OUT)
    bytes_accessed = (
        F_PAD * B_pad * itemsize                       # xT
        + B_pad * 4                                    # output row
        + (H1 * F_PAD + H2 * H1 + H3 * H2) * itemsize  # resident weights
        + (H3 * F_OUT + H1 + H2 + H3 + 1) * 4          # w4 + biases
    )

    out = pl.pallas_call(
        fnn_kernel,
        out_shape=jax.ShapeDtypeStruct((1, B_pad), jnp.float32),
        grid=grid,
        in_specs=[
            pl.BlockSpec((F_PAD, tb), lambda i: (0, i)),   # x tile, pipelined
            resident(w1T), resident(b1),
            resident(w2T), resident(b2),
            resident(w3T), resident(b3),
            resident(w4), resident(b4),
        ],
        out_specs=pl.BlockSpec((1, tb), lambda i: (0, i)),  # lane-dense output row
        compiler_params=pltpu.CompilerParams(
            dimension_semantics=("parallel",),
        ),
        cost_estimate=pl.CostEstimate(
            flops=int(flops), transcendentals=0, bytes_accessed=int(bytes_accessed)),
    )(xT, w1T, b1, w2T, b2, w3T, b3, w4, b4)

    return out[0, :B].reshape(B, 1)


def init_params(key):
    """Deterministic init mimicking nn.Linear's U(-1/sqrt(fan_in), 1/sqrt(fan_in))."""
    dims = [(F_IN, H1), (H1, H2), (H2, H3), (H3, F_OUT)]
    params = {}
    for i, (fan_in, fan_out) in enumerate(dims, start=1):
        key, kw, kb = jax.random.split(key, 3)
        bound = 1.0 / jnp.sqrt(jnp.float32(fan_in))
        # Stored as (in, out): transpose of PyTorch's (out, in) weight layout.
        params[f"w{i}"] = jax.random.uniform(
            kw, (fan_in, fan_out), jnp.float32, minval=-bound, maxval=bound)
        params[f"b{i}"] = jax.random.uniform(
            kb, (1, fan_out), jnp.float32, minval=-bound, maxval=bound)
    return params


def fnn_reference(x, params):
    """Pure-f32 reference (matches the PyTorch module's forward)."""
    h = jnp.maximum(x @ params["w1"] + params["b1"], 0.0)
    h = jnp.maximum(h @ params["w2"] + params["b2"], 0.0)
    h = jnp.maximum(h @ params["w3"] + params["b3"], 0.0)
    return h @ params["w4"] + params["b4"]


def fnn_reference_matched(x, params, cdt):
    """Pure-JAX reference using the kernel's mixed-precision policy."""
    h = x
    for i in (1, 2, 3):
        h = jnp.dot(h.astype(cdt), params[f"w{i}"].astype(cdt),
                    preferred_element_type=jnp.float32) + params[f"b{i}"]
        h = jnp.maximum(h, 0.0)
    return h @ params["w4"] + params["b4"]


if __name__ == "__main__":
    key = jax.random.PRNGKey(0)
    key, kx = jax.random.split(key)

    # B deliberately NOT a multiple of the tile so padding/tail paths are exercised.
    B = 300
    x = jax.random.normal(kx, (B, F_IN), dtype=jnp.float32)
    params = init_params(key)

    ref_f32 = fnn_reference(x, params)
    ref_bf16 = fnn_reference_matched(x, params, jnp.bfloat16)

    # Default (bf16 fast path); tile chooser gives tb=256 -> grid=(2,).
    out = jax.block_until_ready(fnn_forward(x, params))
    assert out.shape == (B, 1), out.shape
    assert jnp.allclose(out, ref_bf16, atol=1e-3, rtol=1e-3), (
        float(jnp.max(jnp.abs(out - ref_bf16))))
    assert jnp.allclose(out, ref_f32, atol=5e-2, rtol=5e-2), (
        float(jnp.max(jnp.abs(out - ref_f32))))

    # Small tile -> multi-step grid (tb=128, grid=(3,)): exercises x-tile pipelining.
    out_small = jax.block_until_ready(fnn_forward(x, params, tile_b=128))
    assert jnp.allclose(out_small, ref_bf16, atol=1e-3, rtol=1e-3), (
        float(jnp.max(jnp.abs(out_small - ref_bf16))))

    # Full-precision path keeps the original 1e-4 fidelity vs the f32 reference.
    out_f32 = jax.block_until_ready(fnn_forward(x, params, precision="f32"))
    assert jnp.allclose(out_f32, ref_f32, atol=1e-4, rtol=1e-4), (
        float(jnp.max(jnp.abs(out_f32 - ref_f32))))

    print("KERNEL_OK")
</pallas_src>

<mosaic_0001>
module attributes {stable_mosaic.version = 11 : i64} {
  func.func @fnn_kernel(%arg0: i32, %arg1: memref<384x256xbf16, #tpu.memory_space<vmem>>, %arg2: memref<200x384xbf16, #tpu.memory_space<vmem>>, %arg3: memref<200x1xf32, #tpu.memory_space<vmem>>, %arg4: memref<100x200xbf16, #tpu.memory_space<vmem>>, %arg5: memref<100x1xf32, #tpu.memory_space<vmem>>, %arg6: memref<50x100xbf16, #tpu.memory_space<vmem>>, %arg7: memref<50x1xf32, #tpu.memory_space<vmem>>, %arg8: memref<50x1xf32, #tpu.memory_space<vmem>>, %arg9: memref<1x1xf32, #tpu.memory_space<vmem>>, %arg10: memref<1x256xf32, #tpu.memory_space<vmem>>) attributes {dimension_semantics = [#tpu.dimension_semantics<parallel>], iteration_bounds = array<i64: 2>, scalar_prefetch = 0 : i64, scratch_operands = 0 : i64, tpu.core_type = #tpu.core_type<tc>, window_params = [{transform_indices = @transform_0, window_bounds = array<i64: 384, 256>}, {pipeline_mode = #tpu.pipeline_mode<synchronous>, transform_indices = @transform_1, window_bounds = array<i64: 200, 384>}, {pipeline_mode = #tpu.pipeline_mode<synchronous>, transform_indices = @transform_2, window_bounds = array<i64: 200, 1>}, {pipeline_mode = #tpu.pipeline_mode<synchronous>, transform_indices = @transform_3, window_bounds = array<i64: 100, 200>}, {pipeline_mode = #tpu.pipeline_mode<synchronous>, transform_indices = @transform_4, window_bounds = array<i64: 100, 1>}, {pipeline_mode = #tpu.pipeline_mode<synchronous>, transform_indices = @transform_5, window_bounds = array<i64: 50, 100>}, {pipeline_mode = #tpu.pipeline_mode<synchronous>, transform_indices = @transform_6, window_bounds = array<i64: 50, 1>}, {pipeline_mode = #tpu.pipeline_mode<synchronous>, transform_indices = @transform_7, window_bounds = array<i64: 50, 1>}, {pipeline_mode = #tpu.pipeline_mode<synchronous>, transform_indices = @transform_8, window_bounds = array<i64: 1, 1>}, {transform_indices = @transform_9, window_bounds = array<i64: 1, 256>}]} {
    %c0 = arith.constant 0 : index
    %c0_0 = arith.constant 0 : index
    %0 = vector.load %arg1[%c0, %c0_0] : memref<384x256xbf16, #tpu.memory_space<vmem>>, vector<384x256xbf16>
    %c0_1 = arith.constant 0 : index
    %c0_2 = arith.constant 0 : index
    %1 = vector.load %arg2[%c0_1, %c0_2] : memref<200x384xbf16, #tpu.memory_space<vmem>>, vector<200x384xbf16>
    %cst = arith.constant dense<0.000000e+00> : vector<200x256xf32>
    %2 = tpu.matmul %1, %0, %cst {dimension_numbers = #tpu.dot_dimension_numbers<[1], [0], [0], [1], [0, 0, 1, 1], [], []>} : vector<200x384xbf16>, vector<384x256xbf16>, vector<200x256xf32> -> vector<200x256xf32>
    %c0_3 = arith.constant 0 : index
    %c0_4 = arith.constant 0 : index
    %3 = vector.load %arg3[%c0_3, %c0_4] : memref<200x1xf32, #tpu.memory_space<vmem>>, vector<200x1xf32>
    %4 = vector.broadcast %3 : vector<200x1xf32> to vector<200x256xf32>
    %5 = arith.addf %2, %4 : vector<200x256xf32>
    %cst_5 = arith.constant 0.000000e+00 : f32
    %6 = vector.broadcast %cst_5 : f32 to vector<200x256xf32>
    %7 = arith.maximumf %5, %6 : vector<200x256xf32>
    %c0_6 = arith.constant 0 : index
    %c0_7 = arith.constant 0 : index
    %8 = vector.load %arg4[%c0_6, %c0_7] : memref<100x200xbf16, #tpu.memory_space<vmem>>, vector<100x200xbf16>
    %9 = arith.truncf %7 : vector<200x256xf32> to vector<200x256xbf16>
    %cst_8 = arith.constant dense<0.000000e+00> : vector<100x256xf32>
    %10 = tpu.matmul %8, %9, %cst_8 {dimension_numbers = #tpu.dot_dimension_numbers<[1], [0], [0], [1], [0, 0, 1, 1], [], []>} : vector<100x200xbf16>, vector<200x256xbf16>, vector<100x256xf32> -> vector<100x256xf32>
    %c0_9 = arith.constant 0 : index
    %c0_10 = arith.constant 0 : index
    %11 = vector.load %arg5[%c0_9, %c0_10] : memref<100x1xf32, #tpu.memory_space<vmem>>, vector<100x1xf32>
    %12 = vector.broadcast %11 : vector<100x1xf32> to vector<100x256xf32>
    %13 = arith.addf %10, %12 : vector<100x256xf32>
    %cst_11 = arith.constant 0.000000e+00 : f32
    %14 = vector.broadcast %cst_11 : f32 to vector<100x256xf32>
    %15 = arith.maximumf %13, %14 : vector<100x256xf32>
    %c0_12 = arith.constant 0 : index
    %c0_13 = arith.constant 0 : index
    %16 = vector.load %arg6[%c0_12, %c0_13] : memref<50x100xbf16, #tpu.memory_space<vmem>>, vector<50x100xbf16>
    %17 = arith.truncf %15 : vector<100x256xf32> to vector<100x256xbf16>
    %cst_14 = arith.constant dense<0.000000e+00> : vector<50x256xf32>
    %18 = tpu.matmul %16, %17, %cst_14 {dimension_numbers = #tpu.dot_dimension_numbers<[1], [0], [0], [1], [0, 0, 1, 1], [], []>} : vector<50x100xbf16>, vector<100x256xbf16>, vector<50x256xf32> -> vector<50x256xf32>
    %c0_15 = arith.constant 0 : index
    %c0_16 = arith.constant 0 : index
    %19 = vector.load %arg7[%c0_15, %c0_16] : memref<50x1xf32, #tpu.memory_space<vmem>>, vector<50x1xf32>
    %20 = vector.broadcast %19 : vector<50x1xf32> to vector<50x256xf32>
    %21 = arith.addf %18, %20 : vector<50x256xf32>
    %cst_17 = arith.constant 0.000000e+00 : f32
    %22 = vector.broadcast %cst_17 : f32 to vector<50x256xf32>
    %23 = arith.maximumf %21, %22 : vector<50x256xf32>
    %c0_18 = arith.constant 0 : index
    %c0_19 = arith.constant 0 : index
    %24 = vector.load %arg8[%c0_18, %c0_19] : memref<50x1xf32, #tpu.memory_space<vmem>>, vector<50x1xf32>
    %25 = vector.broadcast %24 : vector<50x1xf32> to vector<50x256xf32>
    %26 = arith.mulf %23, %25 : vector<50x256xf32>
    %cst_20 = arith.constant dense<0.000000e+00> : vector<256xf32>
    %27 = vector.multi_reduction <add>, %26, %cst_20 [0] : vector<50x256xf32> to vector<256xf32>
    %28 = vector.shape_cast %27 : vector<256xf32> to vector<1x256xf32>
    %c0_21 = arith.constant 0 : index
    %c0_22 = arith.constant 0 : index
    %29 = vector.load %arg9[%c0_21, %c0_22] : memref<1x1xf32, #tpu.memory_space<vmem>>, vector<1x1xf32>
    %30 = vector.broadcast %29 : vector<1x1xf32> to vector<1x256xf32>
    %31 = arith.addf %28, %30 : vector<1x256xf32>
    %c0_23 = arith.constant 0 : index
    %c0_24 = arith.constant 0 : index
    %32 = vector.load %arg10[%c0_23, %c0_24] : memref<1x256xf32, #tpu.memory_space<vmem>>, vector<1x256xf32>
    tpu.vector_store %arg10[%c0_23, %c0_24], %31 {strides = array<i32>} : memref<1x256xf32, #tpu.memory_space<vmem>>, vector<1x256xf32>,
    return
  }
  func.func @transform_0(%arg0: i32) -> (i32, i32) {
    %c0_i32 = arith.constant 0 : i32
    %c0_i32_0 = arith.constant 0 : i32
    return %c0_i32, %arg0 : i32, i32
  }
  func.func @transform_1(%arg0: i32) -> (i32, i32) {
    %c0_i32 = arith.constant 0 : i32
    %c0_i32_0 = arith.constant 0 : i32
    %c0_i32_1 = arith.constant 0 : i32
    return %c0_i32, %c0_i32_0 : i32, i32
  }
  func.func @transform_2(%arg0: i32) -> (i32, i32) {
    %c0_i32 = arith.constant 0 : i32
    %c0_i32_0 = arith.constant 0 : i32
    %c0_i32_1 = arith.constant 0 : i32
    return %c0_i32, %c0_i32_0 : i32, i32
  }
  func.func @transform_3(%arg0: i32) -> (i32, i32) {
    %c0_i32 = arith.constant 0 : i32
    %c0_i32_0 = arith.constant 0 : i32
    %c0_i32_1 = arith.constant 0 : i32
    return %c0_i32, %c0_i32_0 : i32, i32
  }
  func.func @transform_4(%arg0: i32) -> (i32, i32) {
    %c0_i32 = arith.constant 0 : i32
    %c0_i32_0 = arith.constant 0 : i32
    %c0_i32_1 = arith.constant 0 : i32
    return %c0_i32, %c0_i32_0 : i32, i32
  }
  func.func @transform_5(%arg0: i32) -> (i32, i32) {
    %c0_i32 = arith.constant 0 : i32
    %c0_i32_0 = arith.constant 0 : i32
    %c0_i32_1 = arith.constant 0 : i32
    return %c0_i32, %c0_i32_0 : i32, i32
  }
  func.func @transform_6(%arg0: i32) -> (i32, i32) {
    %c0_i32 = arith.constant 0 : i32
    %c0_i32_0 = arith.constant 0 : i32
    %c0_i32_1 = arith.constant 0 : i32
    return %c0_i32, %c0_i32_0 : i32, i32
  }
  func.func @transform_7(%arg0: i32) -> (i32, i32) {
    %c0_i32 = arith.constant 0 : i32
    %c0_i32_0 = arith.constant 0 : i32
    %c0_i32_1 = arith.constant 0 : i32
    return %c0_i32, %c0_i32_0 : i32, i32
  }
  func.func @transform_8(%arg0: i32) -> (i32, i32) {
    %c0_i32 = arith.constant 0 : i32
    %c0_i32_0 = arith.constant 0 : i32
    %c0_i32_1 = arith.constant 0 : i32
    return %c0_i32, %c0_i32_0 : i32, i32
  }
  func.func @transform_9(%arg0: i32) -> (i32, i32) {
    %c0_i32 = arith.constant 0 : i32
    %c0_i32_0 = arith.constant 0 : i32
    return %c0_i32, %arg0 : i32, i32
  }
}

</mosaic_0001>

<llo_original>
// kernel: tpu_custom_call.1
$region0: #{tpu_custom_call.1}
  #allocation0 [shape = 'u32[]', space=smem, size = 0x4, offset = 0x4, fixed_abs, tag = 'smem constant byte address 0x4 - core index']
  #allocation1 [shape = 'u32[144,128]{1,0:T(1,128)}', space=vmem, size = 0x12000, scoped, tag = 'internal scratch']
  #allocation2 [shape = 'f32[1,1]{1,0:T(1,128)S(1)}', space=vmem, size = 0x200, scoped, tag = 'scoped memory for tpu_custom_call.1']
  %s0 = inlined_call_operand.hbm [shape: bf16[384,512], index: 0, kind: input, shape index: {}]
  %s1 = inlined_call_operand.vmem [shape: bf16[200,384], index: 1, kind: input, shape index: {}]
  %s2 = inlined_call_operand.vmem [shape: f32[200,1], index: 2, kind: input, shape index: {}]
  %s3 = inlined_call_operand.vmem [shape: bf16[100,200], index: 3, kind: input, shape index: {}]
  %s4 = inlined_call_operand.vmem [shape: f32[100,1], index: 4, kind: input, shape index: {}]
  %s5 = inlined_call_operand.vmem [shape: bf16[50,100], index: 5, kind: input, shape index: {}]
  %s6 = inlined_call_operand.vmem [shape: f32[50,1], index: 6, kind: input, shape index: {}]
  %s7 = inlined_call_operand.vmem [shape: f32[50,1], index: 7, kind: input, shape index: {}]
  %s8 = inlined_call_operand.<no memory space> [shape: f32[1,1], index: 8, kind: input, shape index: {}]
  %s9 = inlined_call_operand.hbm [shape: f32[1,512], index: 9, kind: output, shape index: {}]
  %s10 = sld [smem:[#allocation0]]
  $region73: #{tpu_custom_call.1} parent=0
    _
  %s12 = ssub.s32 1, %s10
  %s13 = scalar_select 0, %s12, %s10
  %v14 = vstv %s8
  %15 = vst [vmem:[#allocation2] sm:$0x1] %v14
  $region1: #{tpu_custom_call.1} parent=0
    #allocation3 [shape = 'u8[393216]{0}', space=vmem, size = 0x60000, scoped, tag = 'input window, operand 0']
    #allocation4 [shape = 's32[2]{0}', space=sflag, size = 0x8, scoped, tag = 'scoped memory for tpu_custom_call.1']
    #allocation5 [shape = 's32[2]{0}', space=sflag, size = 0x8, scoped, tag = 'scoped memory for tpu_custom_call.1']
    #allocation6 [shape = 'u8[2048]{0}', space=vmem, size = 0x800, scoped, tag = 'output window, operand 0']
    %16 = vsyncpa [#allocation4], 0
    %s17 = scalar_lea.sflag [#allocation4], 1
    %18 = vsyncpa %s17, 0
    %19 = vsyncpa [#allocation5], 0
    %s20 = scalar_lea.sflag [#allocation5], 1
    %21 = vsyncpa %s20, 0
    loop: start=0, step=1, limit=4
    $region2: #{tpu_custom_call.1} parent=1 // loop_pre_header
      _
    $region3: #{tpu_custom_call.1} parent=1 // loop_header
      %s23 = sphi 0, %s27
      %p24 = scmp.ge.s32.totalorder %s23, 4
      %s33 = sphi 0, %s35
      %s36 = sphi 0, %s33
      %s37 = sphi 0, %s36
      %s53 = sphi 0, %s37
      %s57 = sphi 0, %s57
      %s59 = sphi 0, %s57
      %s60 = sphi 0, %s59
      %s74 = sphi 0, %s60
      %s78 = sphi 0, %s78
      %s80 = sphi 0, %s78
      %s81 = sphi 0, %s80
      %s95 = sphi 0, %s81
      %s99 = sphi 0, %s99
      %s101 = sphi 0, %s99
      %s102 = sphi 0, %s101
      %s116 = sphi 0, %s102
      %s120 = sphi 0, %s120
      %s122 = sphi 0, %s120
      %s123 = sphi 0, %s122
      %s137 = sphi 0, %s123
      %s141 = sphi 0, %s141
      %s143 = sphi 0, %s141
      %s144 = sphi 0, %s143
      %s158 = sphi 0, %s144
      %s162 = sphi 0, %s162
      %s164 = sphi 0, %s162
      %s165 = sphi 0, %s164
      %s179 = sphi 0, %s165
      %s183 = sphi 0, %s183
      %s185 = sphi 0, %s183
      %s186 = sphi 0, %s185
      %s200 = sphi 0, %s186
      %s204 = sphi 0, %s204
      %s206 = sphi 0, %s204
      %s207 = sphi 0, %s206
      %s221 = sphi 0, %s207
      %s227 = sphi 0, %s229
      %s230 = sphi 0, %s227
      %s231 = sphi 0, %s230
      %s247 = sphi 0, %s231
    $region4: #{tpu_custom_call.1} parent=1 // loop_header_branch
      %26 = sbr.rel (%p24) target = $region8
    $region5: #{tpu_custom_call.1} parent=1 // loop_body
      %s28 = ssub.s32 %s23, 1
      %s29 = ssub.s32 %s23, 2
      %s30 = sadd.s32 %s23, 1
      %s31 = ssub.s32 %s23, %s30
      %p32 = scmp.eq.s32.totalorder %s31, 0
      %s34 = sadd.s32 %s33, 1
      %s35 = scalar_select %p32, %s33, %s34
      %p38 = pneg %p32
      %p39 = scmp.eq.s32.totalorder %s23, 1
      %p40 = por %p38, %p39
      %p41 = scmp.ne.s32.totalorder %s33, %s36
      %p42 = scmp.eq.s32.totalorder %s23, 0
      %p43 = por %p41, %p42
      %p44 = scmp.ne.s32.totalorder %s33, %s36
      %p45 = scmp.eq.s32.totalorder %s28, 1
      %p46 = por %p44, %p45
      %p47 = scmp.ne.s32.totalorder %s36, %s37
      %p48 = scmp.eq.s32.totalorder %s28, 0
      %p49 = por %p47, %p48
      %p50 = scmp.ne.s32.totalorder %s36, %s37
      %p51 = scmp.eq.s32.totalorder %s29, 1
      %p52 = por %p50, %p51
      %p54 = scmp.ne.s32.totalorder %s37, %s53
      %p55 = scmp.eq.s32.totalorder %s29, 0
      %p56 = por %p54, %p55
      %s58 = sadd.s32 %s57, 1
      %p61 = scmp.eq.s32.totalorder %s23, 1
      %p62 = scmp.ne.s32.totalorder %s57, %s59
      %p63 = scmp.eq.s32.totalorder %s23, 0
      %p64 = por %p62, %p63
      %p65 = scmp.ne.s32.totalorder %s57, %s59
      %p66 = scmp.eq.s32.totalorder %s28, 1
      %p67 = por %p65, %p66
      %p68 = scmp.ne.s32.totalorder %s59, %s60
      %p69 = scmp.eq.s32.totalorder %s28, 0
      %p70 = por %p68, %p69
      %p71 = scmp.ne.s32.totalorder %s59, %s60
      %p72 = scmp.eq.s32.totalorder %s29, 1
      %p73 = por %p71, %p72
      %p75 = scmp.ne.s32.totalorder %s60, %s74
      %p76 = scmp.eq.s32.totalorder %s29, 0
      %p77 = por %p75, %p76
      %s79 = sadd.s32 %s78, 1
      %p82 = scmp.eq.s32.totalorder %s23, 1
      %p83 = scmp.ne.s32.totalorder %s78, %s80
      %p84 = scmp.eq.s32.totalorder %s23, 0
      %p85 = por %p83, %p84
      %p86 = scmp.ne.s32.totalorder %s78, %s80
      %p87 = scmp.eq.s32.totalorder %s28, 1
      %p88 = por %p86, %p87
      %p89 = scmp.ne.s32.totalorder %s80, %s81
      %p90 = scmp.eq.s32.totalorder %s28, 0
      %p91 = por %p89, %p90
      %p92 = scmp.ne.s32.totalorder %s80, %s81
      %p93 = scmp.eq.s32.totalorder %s29, 1
      %p94 = por %p92, %p93
      %p96 = scmp.ne.s32.totalorder %s81, %s95
      %p97 = scmp.eq.s32.totalorder %s29, 0
      %p98 = por %p96, %p97
      %s100 = sadd.s32 %s99, 1
      %p103 = scmp.eq.s32.totalorder %s23, 1
      %p104 = scmp.ne.s32.totalorder %s99, %s101
      %p105 = scmp.eq.s32.totalorder %s23, 0
      %p106 = por %p104, %p105
      %p107 = scmp.ne.s32.totalorder %s99, %s101
      %p108 = scmp.eq.s32.totalorder %s28, 1
      %p109 = por %p107, %p108
      %p110 = scmp.ne.s32.totalorder %s101, %s102
      %p111 = scmp.eq.s32.totalorder %s28, 0
      %p112 = por %p110, %p111
      %p113 = scmp.ne.s32.totalorder %s101, %s102
      %p114 = scmp.eq.s32.totalorder %s29, 1
      %p115 = por %p113, %p114
      %p117 = scmp.ne.s32.totalorder %s102, %s116
      %p118 = scmp.eq.s32.totalorder %s29, 0
      %p119 = por %p117, %p118
      %s121 = sadd.s32 %s120, 1
      %p124 = scmp.eq.s32.totalorder %s23, 1
      %p125 = scmp.ne.s32.totalorder %s120, %s122
      %p126 = scmp.eq.s32.totalorder %s23, 0
      %p127 = por %p125, %p126
      %p128 = scmp.ne.s32.totalorder %s120, %s122
      %p129 = scmp.eq.s32.totalorder %s28, 1
      %p130 = por %p128, %p129
      %p131 = scmp.ne.s32.totalorder %s122, %s123
      %p132 = scmp.eq.s32.totalorder %s28, 0
      %p133 = por %p131, %p132
      %p134 = scmp.ne.s32.totalorder %s122, %s123
      %p135 = scmp.eq.s32.totalorder %s29, 1
      %p136 = por %p134, %p135
      %p138 = scmp.ne.s32.totalorder %s123, %s137
      %p139 = scmp.eq.s32.totalorder %s29, 0
      %p140 = por %p138, %p139
      %s142 = sadd.s32 %s141, 1
      %p145 = scmp.eq.s32.totalorder %s23, 1
      %p146 = scmp.ne.s32.totalorder %s141, %s143
      %p147 = scmp.eq.s32.totalorder %s23, 0
      %p148 = por %p146, %p147
      %p149 = scmp.ne.s32.totalorder %s141, %s143
      %p150 = scmp.eq.s32.totalorder %s28, 1
      %p151 = por %p149, %p150
      %p152 = scmp.ne.s32.totalorder %s143, %s144
      %p153 = scmp.eq.s32.totalorder %s28, 0
      %p154 = por %p152, %p153
      %p155 = scmp.ne.s32.totalorder %s143, %s144
      %p156 = scmp.eq.s32.totalorder %s29, 1
      %p157 = por %p155, %p156
      %p159 = scmp.ne.s32.totalorder %s144, %s158
      %p160 = scmp.eq.s32.totalorder %s29, 0
      %p161 = por %p159, %p160
      %s163 = sadd.s32 %s162, 1
      %p166 = scmp.eq.s32.totalorder %s23, 1
      %p167 = scmp.ne.s32.totalorder %s162, %s164
      %p168 = scmp.eq.s32.totalorder %s23, 0
      %p169 = por %p167, %p168
      %p170 = scmp.ne.s32.totalorder %s162, %s164
      %p171 = scmp.eq.s32.totalorder %s28, 1
      %p172 = por %p170, %p171
      %p173 = scmp.ne.s32.totalorder %s164, %s165
      %p174 = scmp.eq.s32.totalorder %s28, 0
      %p175 = por %p173, %p174
      %p176 = scmp.ne.s32.totalorder %s164, %s165
      %p177 = scmp.eq.s32.totalorder %s29, 1
      %p178 = por %p176, %p177
      %p180 = scmp.ne.s32.totalorder %s165, %s179
      %p181 = scmp.eq.s32.totalorder %s29, 0
      %p182 = por %p180, %p181
      %s184 = sadd.s32 %s183, 1
      %p187 = scmp.eq.s32.totalorder %s23, 1
      %p188 = scmp.ne.s32.totalorder %s183, %s185
      %p189 = scmp.eq.s32.totalorder %s23, 0
      %p190 = por %p188, %p189
      %p191 = scmp.ne.s32.totalorder %s183, %s185
      %p192 = scmp.eq.s32.totalorder %s28, 1
      %p193 = por %p191, %p192
      %p194 = scmp.ne.s32.totalorder %s185, %s186
      %p195 = scmp.eq.s32.totalorder %s28, 0
      %p196 = por %p194, %p195
      %p197 = scmp.ne.s32.totalorder %s185, %s186
      %p198 = scmp.eq.s32.totalorder %s29, 1
      %p199 = por %p197, %p198
      %p201 = scmp.ne.s32.totalorder %s186, %s200
      %p202 = scmp.eq.s32.totalorder %s29, 0
      %p203 = por %p201, %p202
      %s205 = sadd.s32 %s204, 1
      %p208 = scmp.eq.s32.totalorder %s23, 1
      %p209 = scmp.ne.s32.totalorder %s204, %s206
      %p210 = scmp.eq.s32.totalorder %s23, 0
      %p211 = por %p209, %p210
      %p212 = scmp.ne.s32.totalorder %s204, %s206
      %p213 = scmp.eq.s32.totalorder %s28, 1
      %p214 = por %p212, %p213
      %p215 = scmp.ne.s32.totalorder %s206, %s207
      %p216 = scmp.eq.s32.totalorder %s28, 0
      %p217 = por %p215, %p216
      %p218 = scmp.ne.s32.totalorder %s206, %s207
      %p219 = scmp.eq.s32.totalorder %s29, 1
      %p220 = por %p218, %p219
      %p222 = scmp.ne.s32.totalorder %s207, %s221
      %p223 = scmp.eq.s32.totalorder %s29, 0
      %p224 = por %p222, %p223
      %s225 = ssub.s32 %s23, %s30
      %p226 = scmp.eq.s32.totalorder %s225, 0
      %s228 = sadd.s32 %s227, 1
      %s229 = scalar_select %p226, %s227, %s228
      %p232 = pneg %p226
      %p233 = scmp.eq.s32.totalorder %s23, 1
      %p234 = por %p232, %p233
      %p235 = scmp.ne.s32.totalorder %s227, %s230
      %p236 = scmp.eq.s32.totalorder %s23, 0
      %p237 = por %p235, %p236
      %p238 = scmp.ne.s32.totalorder %s227, %s230
      %p239 = scmp.eq.s32.totalorder %s28, 1
      %p240 = por %p238, %p239
      %p241 = scmp.ne.s32.totalorder %s230, %s231
      %p242 = scmp.eq.s32.totalorder %s28, 0
      %p243 = por %p241, %p242
      %p244 = scmp.ne.s32.totalorder %s230, %s231
      %p245 = scmp.eq.s32.totalorder %s29, 1
      %p246 = por %p244, %p245
      %p248 = scmp.ne.s32.totalorder %s231, %s247
      %p249 = scmp.eq.s32.totalorder %s29, 0
      %p250 = por %p248, %p249
      %p251 = scmp.le.s32.totalorder 1, %s23
      %p252 = scmp.lt.s32.totalorder %s23, 3
      %p253 = pnand %p251, %p252
      %p254 = pneg %p253
      // Predicated region
      $region9: #{tpu_custom_call.1} parent=5 // pred_check
        _
      $region10: #{tpu_custom_call.1} parent=5 // pred_check_branch
        %256 = sbr.rel (%p253) target = $region12
      $region11: #{tpu_custom_call.1} parent=5 // pred_region
        %s257 = ssub.s32 %s23, 1
        // Predicated region
        $region13: #{tpu_custom_call.1} parent=11 // pred_check
          %p258 = pneg %p70
        $region14: #{tpu_custom_call.1} parent=11 // pred_check_branch
          %260 = sbr.rel (%p258) target = $region16
        $region15: #{tpu_custom_call.1} parent=11 // pred_region
          _
        $region16: #{tpu_custom_call.1} parent=11 // pred_fallthru
          _
        // Predicated region
        $region17: #{tpu_custom_call.1} parent=11 // pred_check
          %p261 = pneg %p91
        $region18: #{tpu_custom_call.1} parent=11 // pred_check_branch
          %263 = sbr.rel (%p261) target = $region20
        $region19: #{tpu_custom_call.1} parent=11 // pred_region
          _
        $region20: #{tpu_custom_call.1} parent=11 // pred_fallthru
          _
        // Predicated region
        $region21: #{tpu_custom_call.1} parent=11 // pred_check
          %p264 = pneg %p112
        $region22: #{tpu_custom_call.1} parent=11 // pred_check_branch
          %266 = sbr.rel (%p264) target = $region24
        $region23: #{tpu_custom_call.1} parent=11 // pred_region
          _
        $region24: #{tpu_custom_call.1} parent=11 // pred_fallthru
          _
        // Predicated region
        $region25: #{tpu_custom_call.1} parent=11 // pred_check
          %p267 = pneg %p133
        $region26: #{tpu_custom_call.1} parent=11 // pred_check_branch
          %269 = sbr.rel (%p267) target = $region28
        $region27: #{tpu_custom_call.1} parent=11 // pred_region
          _
        $region28: #{tpu_custom_call.1} parent=11 // pred_fallthru
          _
        // Predicated region
        $region29: #{tpu_custom_call.1} parent=11 // pred_check
          %p270 = pneg %p154
        $region30: #{tpu_custom_call.1} parent=11 // pred_check_branch
          %272 = sbr.rel (%p270) target = $region32
        $region31: #{tpu_custom_call.1} parent=11 // pred_region
          _
        $region32: #{tpu_custom_call.1} parent=11 // pred_fallthru
          _
        // Predicated region
        $region33: #{tpu_custom_call.1} parent=11 // pred_check
          %p273 = pneg %p175
        $region34: #{tpu_custom_call.1} parent=11 // pred_check_branch
          %275 = sbr.rel (%p273) target = $region36
        $region35: #{tpu_custom_call.1} parent=11 // pred_region
          _
        $region36: #{tpu_custom_call.1} parent=11 // pred_fallthru
          _
        // Predicated region
        $region37: #{tpu_custom_call.1} parent=11 // pred_check
          %p276 = pneg %p196
        $region38: #{tpu_custom_call.1} parent=11 // pred_check_branch
          %278 = sbr.rel (%p276) target = $region40
        $region39: #{tpu_custom_call.1} parent=11 // pred_region
          _
        $region40: #{tpu_custom_call.1} parent=11 // pred_fallthru
          _
        // Predicated region
        $region41: #{tpu_custom_call.1} parent=11 // pred_check
          %p279 = pneg %p217
        $region42: #{tpu_custom_call.1} parent=11 // pred_check_branch
          %281 = sbr.rel (%p279) target = $region44
        $region43: #{tpu_custom_call.1} parent=11 // pred_region
          _
        $region44: #{tpu_custom_call.1} parent=11 // pred_fallthru
          _
      $region12: #{tpu_custom_call.1} parent=5 // pred_fallthru
        _
      %p282 = scmp.lt.s32.totalorder %s23, 2
      // Predicated region
      $region45: #{tpu_custom_call.1} parent=5 // pred_check
        %p283 = pneg %p282
      $region46: #{tpu_custom_call.1} parent=5 // pred_check_branch
        %285 = sbr.rel (%p283) target = $region48
      $region47: #{tpu_custom_call.1} parent=5 // pred_region
        // Predicated region
        $region49: #{tpu_custom_call.1} parent=47 // pred_check
          %p286 = pneg %p43
        $region50: #{tpu_custom_call.1} parent=47 // pred_check_branch
          %288 = sbr.rel (%p286) target = $region52
        $region51: #{tpu_custom_call.1} parent=47 // pred_region
          %s289 = sand.u32 %s33, 1
          %s290 = scalar_lea.sflag [#allocation4], %s289
          %s291 = sand.u32 %s33, 1
          %s292 = smul.addr %s291, 384
          %s293 = scalar_lea.vmem [#allocation3], %s292
          %s294 = smul.u32 2, %s23
          %s296 = ssub.s32 6144, 6144
          %297 = vsyncadd %s290, %s296
          %s298 = smul.addr %s294, 64
          %s299 = scalar_lea.hbm %s0, %s298
          %s300 = sshll.u32 %s293, 4
          %s301 = int_to_ptr.vmem [resolvable:$true] %s300
          %306 = dma.hbm_to_vmem [thread:$0]  %s299, 6144, %s301, %s290, 256, 128, 8
        $region52: #{tpu_custom_call.1} parent=47 // pred_fallthru
          _
      $region48: #{tpu_custom_call.1} parent=5 // pred_fallthru
        _
      %p307 = scmp.le.s32.totalorder 1, %s23
      %p308 = scmp.lt.s32.totalorder %s23, 3
      %p309 = pnand %p307, %p308
      %p310 = pneg %p309
      // Predicated region
      $region53: #{tpu_custom_call.1} parent=5 // pred_check
        _
      $region54: #{tpu_custom_call.1} parent=5 // pred_check_branch
        %312 = sbr.rel (%p309) target = $region56
      $region55: #{tpu_custom_call.1} parent=5 // pred_region
        %s313 = ssub.s32 %s23, 1
        %s314 = sand.u32 %s36, 1
        %s315 = scalar_lea.sflag [#allocation4], %s314
        %s316 = sand.u32 %s36, 1
        %s317 = smul.addr %s316, 384
        %s318 = scalar_lea.vmem [#allocation3], %s317
        // Predicated region
        $region57: #{tpu_custom_call.1} parent=55 // pred_check
          %p319 = pneg %p49
        $region58: #{tpu_custom_call.1} parent=55 // pred_check_branch
          %321 = sbr.rel (%p319) target = $region60
        $region59: #{tpu_custom_call.1} parent=55 // pred_region
          %322 = dma.done %s315, 6144
        $region60: #{tpu_custom_call.1} parent=55 // pred_fallthru
          _
        %s323 = sand.u32 %s36, 1
        %s324 = scalar_lea.sflag [#allocation4], %s323
        %s325 = sand.u32 %s36, 1
        %s326 = smul.addr %s325, 384
        %s327 = scalar_lea.vmem [#allocation3], %s326
        %p328 = pneg %p49
        %p329 = pneg %p46
        %p330 = pneg %p70
        %p331 = pneg %p67
        %p332 = pneg %p91
        %p333 = pneg %p88
        %p334 = pneg %p112
        %p335 = pneg %p109
        %p336 = pneg %p133
        %p337 = pneg %p130
        %p338 = pneg %p154
        %p339 = pneg %p151
        %p340 = pneg %p175
        %p341 = pneg %p172
        %p342 = pneg %p196
        %p343 = pneg %p193
        %p344 = pneg %p217
        %p345 = pneg %p214
        %p346 = pneg %p243
        %p347 = pneg %p240
        %s348 = sand.u32 %s230, 1
        %s349 = scalar_lea.sflag [#allocation5], %s348
        %s350 = sand.u32 %s230, 1
        %s351 = smul.addr %s350, 2
        %s352 = scalar_lea.vmem [#allocation6], %s351
        %s353 = smul.u32 2, %s28
        %s354 = smul.u32 2, %s28
        %v356 = vld [vmem:[%s318] sm:$0xff]
        %v357 = vld [vmem:[%s318 + $0x8] sm:$0xff]
        %v358 = vld [vmem:[%s318 + $0x10] sm:$0xff]
        %v359 = vld [vmem:[%s318 + $0x18] sm:$0xff]
        %v360 = vld [vmem:[%s318 + $0x20] sm:$0xff]
        %v361 = vld [vmem:[%s318 + $0x28] sm:$0xff]
        %v362 = vld [vmem:[%s318 + $0x30] sm:$0xff]
        %v363 = vld [vmem:[%s318 + $0x38] sm:$0xff]
        %v364 = vld [vmem:[%s318 + $0x40] sm:$0xff]
        %v365 = vld [vmem:[%s318 + $0x48] sm:$0xff]
        %v366 = vld [vmem:[%s318 + $0x50] sm:$0xff]
        %v367 = vld [vmem:[%s318 + $0x58] sm:$0xff]
        %v368 = vld [vmem:[%s318 + $0x60] sm:$0xff]
        %v369 = vld [vmem:[%s318 + $0x68] sm:$0xff]
        %v370 = vld [vmem:[%s318 + $0x70] sm:$0xff]
        %v371 = vld [vmem:[%s318 + $0x78] sm:$0xff]
        %v372 = vld [vmem:[%s318 + $0x80] sm:$0xff]
        %v373 = vld [vmem:[%s318 + $0x88] sm:$0xff]
        %v374 = vld [vmem:[%s318 + $0x90] sm:$0xff]
        %v375 = vld [vmem:[%s318 + $0x98] sm:$0xff]
        %v376 = vld [vmem:[%s318 + $0xa0] sm:$0xff]
        %v377 = vld [vmem:[%s318 + $0xa8] sm:$0xff]
        %v378 = vld [vmem:[%s318 + $0xb0] sm:$0xff]
        %v379 = vld [vmem:[%s318 + $0xb8] sm:$0xff]
        %v380 = vld [vmem:[%s318 + $0xc0] sm:$0xff]
        %v381 = vld [vmem:[%s318 + $0xc8] sm:$0xff]
        %v382 = vld [vmem:[%s318 + $0xd0] sm:$0xff]
        %v383 = vld [vmem:[%s318 + $0xd8] sm:$0xff]
        %v384 = vld [vmem:[%s318 + $0xe0] sm:$0xff]
        %v385 = vld [vmem:[%s318 + $0xe8] sm:$0xff]
        %v386 = vld [vmem:[%s318 + $0xf0] sm:$0xff]
        %v387 = vld [vmem:[%s318 + $0xf8] sm:$0xff]
        %v388 = vld [vmem:[%s318 + $0x100] sm:$0xff]
        %v389 = vld [vmem:[%s318 + $0x108] sm:$0xff]
        %v390 = vld [vmem:[%s318 + $0x110] sm:$0xff]
        %v391 = vld [vmem:[%s318 + $0x118] sm:$0xff]
        %v392 = vld [vmem:[%s318 + $0x120] sm:$0xff]
        %v393 = vld [vmem:[%s318 + $0x128] sm:$0xff]
        %v394 = vld [vmem:[%s318 + $0x130] sm:$0xff]
        %v395 = vld [vmem:[%s318 + $0x138] sm:$0xff]
        %v396 = vld [vmem:[%s318 + $0x140] sm:$0xff]
        %v397 = vld [vmem:[%s318 + $0x148] sm:$0xff]
        %v398 = vld [vmem:[%s318 + $0x150] sm:$0xff]
        %v399 = vld [vmem:[%s318 + $0x158] sm:$0xff]
        %v400 = vld [vmem:[%s318 + $0x160] sm:$0xff]
        %v401 = vld [vmem:[%s318 + $0x168] sm:$0xff]
        %v402 = vld [vmem:[%s318 + $0x170] sm:$0xff]
        %v403 = vld [vmem:[%s318 + $0x178] sm:$0xff]
        %v404 = vld [vmem:[%s1] sm:$0xff]
        %v405 = vld [vmem:[%s1 + $0x8] sm:$0xf]
        %v406 = vld [vmem:[%s1 + $0xc] sm:$0xff]
        %v407 = vld [vmem:[%s1 + $0x14] sm:$0xf]
        %v408 = vld [vmem:[%s1 + $0x18] sm:$0xff]
        %v409 = vld [vmem:[%s1 + $0x20] sm:$0xf]
        %v410 = vld [vmem:[%s1 + $0x24] sm:$0xff]
        %v411 = vld [vmem:[%s1 + $0x2c] sm:$0xf]
        %v412 = vld [vmem:[%s1 + $0x30] sm:$0xff]
        %v413 = vld [vmem:[%s1 + $0x38] sm:$0xf]
        %v414 = vld [vmem:[%s1 + $0x3c] sm:$0xff]
        %v415 = vld [vmem:[%s1 + $0x44] sm:$0xf]
        %v416 = vld [vmem:[%s1 + $0x48] sm:$0xff]
        %v417 = vld [vmem:[%s1 + $0x50] sm:$0xf]
        %v418 = vld [vmem:[%s1 + $0x54] sm:$0xff]
        %v419 = vld [vmem:[%s1 + $0x5c] sm:$0xf]
        %v420 = vld [vmem:[%s1 + $0x60] sm:$0xff]
        %v421 = vld [vmem:[%s1 + $0x68] sm:$0xf]
        %v422 = vld [vmem:[%s1 + $0x6c] sm:$0xff]
        %v423 = vld [vmem:[%s1 + $0x74] sm:$0xf]
        %v424 = vld [vmem:[%s1 + $0x78] sm:$0xff]
        %v425 = vld [vmem:[%s1 + $0x80] sm:$0xf]
        %v426 = vld [vmem:[%s1 + $0x84] sm:$0xff]
        %v427 = vld [vmem:[%s1 + $0x8c] sm:$0xf]
        %v428 = vld [vmem:[%s1 + $0x90] sm:$0xff]
        %v429 = vld [vmem:[%s1 + $0x98] sm:$0xf]
        %v430 = vld [vmem:[%s1 + $0x9c] sm:$0xff]
        %v431 = vld [vmem:[%s1 + $0xa4] sm:$0xf]
        %v432 = vld [vmem:[%s1 + $0xa8] sm:$0xff]
        %v433 = vld [vmem:[%s1 + $0xb0] sm:$0xf]
        %v434 = vld [vmem:[%s1 + $0xb4] sm:$0xff]
        %v435 = vld [vmem:[%s1 + $0xbc] sm:$0xf]
        %v436 = vld [vmem:[%s1 + $0xc0] sm:$0xff]
        %v437 = vld [vmem:[%s1 + $0xc8] sm:$0xf]
        %v438 = vld [vmem:[%s1 + $0xcc] sm:$0xff]
        %v439 = vld [vmem:[%s1 + $0xd4] sm:$0xf]
        %v440 = vld [vmem:[%s1 + $0xd8] sm:$0xff]
        %v441 = vld [vmem:[%s1 + $0xe0] sm:$0xf]
        %v442 = vld [vmem:[%s1 + $0xe4] sm:$0xff]
        %v443 = vld [vmem:[%s1 + $0xec] sm:$0xf]
        %v444 = vld [vmem:[%s1 + $0xf0] sm:$0xff]
        %v445 = vld [vmem:[%s1 + $0xf8] sm:$0xf]
        %v446 = vld [vmem:[%s1 + $0xfc] sm:$0xff]
        %v447 = vld [vmem:[%s1 + $0x104] sm:$0xf]
        %v448 = vld [vmem:[%s1 + $0x108] sm:$0xff]
        %v449 = vld [vmem:[%s1 + $0x110] sm:$0xf]
        %v450 = vld [vmem:[%s1 + $0x114] sm:$0xff]
        %v451 = vld [vmem:[%s1 + $0x11c] sm:$0xf]
        %v452 = vld [vmem:[%s1 + $0x120] sm:$0xff]
        %v453 = vld [vmem:[%s1 + $0x128] sm:$0xf]
        %v454 = vld [vmem:[%s2] sm:$0xff]
        %v455 = vld [vmem:[%s2 + $0x8] sm:$0xff]
        %v456 = vld [vmem:[%s2 + $0x10] sm:$0xff]
        %v457 = vld [vmem:[%s2 + $0x18] sm:$0xff]
        %v458 = vld [vmem:[%s2 + $0x20] sm:$0xff]
        %v459 = vld [vmem:[%s2 + $0x28] sm:$0xff]
        %v460 = vld [vmem:[%s2 + $0x30] sm:$0xff]
        %v461 = vld [vmem:[%s2 + $0x38] sm:$0xff]
        %v462 = vld [vmem:[%s2 + $0x40] sm:$0xff]
        %v463 = vld [vmem:[%s2 + $0x48] sm:$0xff]
        %v464 = vld [vmem:[%s2 + $0x50] sm:$0xff]
        %v465 = vld [vmem:[%s2 + $0x58] sm:$0xff]
        %v466 = vld [vmem:[%s2 + $0x60] sm:$0xff]
        %v467 = vld [vmem:[%s2 + $0x68] sm:$0xff]
        %v468 = vld [vmem:[%s2 + $0x70] sm:$0xff]
        %v469 = vld [vmem:[%s2 + $0x78] sm:$0xff]
        %v470 = vld [vmem:[%s2 + $0x80] sm:$0xff]
        %v471 = vld [vmem:[%s2 + $0x88] sm:$0xff]
        %v472 = vld [vmem:[%s2 + $0x90] sm:$0xff]
        %v473 = vld [vmem:[%s2 + $0x98] sm:$0xff]
        %v474 = vld [vmem:[%s2 + $0xa0] sm:$0xff]
        %v475 = vld [vmem:[%s2 + $0xa8] sm:$0xff]
        %v476 = vld [vmem:[%s2 + $0xb0] sm:$0xff]
        %v477 = vld [vmem:[%s2 + $0xb8] sm:$0xff]
        %v478 = vld [vmem:[%s2 + $0xc0] sm:$0xff]
        %480 = vset.pattern.permute.xlu0 0
        %481 = vperm.xlu0 %480, %v454
        %v482 = vpop.permute.xlu0 %481
        %485 = vset.pattern.permute.xlu0 0
        %486 = vperm.xlu0 %485, %v455
        %v487 = vpop.permute.xlu0 %486
        %490 = vset.pattern.permute.xlu0 0
        %491 = vperm.xlu0 %490, %v456
        %v492 = vpop.permute.xlu0 %491
        %495 = vset.pattern.permute.xlu0 0
        %496 = vperm.xlu0 %495, %v457
        %v497 = vpop.permute.xlu0 %496
        %500 = vset.pattern.permute.xlu0 0
        %501 = vperm.xlu0 %500, %v458
        %v502 = vpop.permute.xlu0 %501
        %505 = vset.pattern.permute.xlu0 0
        %506 = vperm.xlu0 %505, %v459
        %v507 = vpop.permute.xlu0 %506
        %510 = vset.pattern.permute.xlu0 0
        %511 = vperm.xlu0 %510, %v460
        %v512 = vpop.permute.xlu0 %511
        %515 = vset.pattern.permute.xlu0 0
        %516 = vperm.xlu0 %515, %v461
        %v517 = vpop.permute.xlu0 %516
        %520 = vset.pattern.permute.xlu0 0
        %521 = vperm.xlu0 %520, %v462
        %v522 = vpop.permute.xlu0 %521
        %525 = vset.pattern.permute.xlu0 0
        %526 = vperm.xlu0 %525, %v463
        %v527 = vpop.permute.xlu0 %526
        %530 = vset.pattern.permute.xlu0 0
        %531 = vperm.xlu0 %530, %v464
        %v532 = vpop.permute.xlu0 %531
        %535 = vset.pattern.permute.xlu0 0
        %536 = vperm.xlu0 %535, %v465
        %v537 = vpop.permute.xlu0 %536
        %540 = vset.pattern.permute.xlu0 0
        %541 = vperm.xlu0 %540, %v466
        %v542 = vpop.permute.xlu0 %541
        %545 = vset.pattern.permute.xlu0 0
        %546 = vperm.xlu0 %545, %v467
        %v547 = vpop.permute.xlu0 %546
        %550 = vset.pattern.permute.xlu0 0
        %551 = vperm.xlu0 %550, %v468
        %v552 = vpop.permute.xlu0 %551
        %555 = vset.pattern.permute.xlu0 0
        %556 = vperm.xlu0 %555, %v469
        %v557 = vpop.permute.xlu0 %556
        %560 = vset.pattern.permute.xlu0 0
        %561 = vperm.xlu0 %560, %v470
        %v562 = vpop.permute.xlu0 %561
        %565 = vset.pattern.permute.xlu0 0
        %566 = vperm.xlu0 %565, %v471
        %v567 = vpop.permute.xlu0 %566
        %570 = vset.pattern.permute.xlu0 0
        %571 = vperm.xlu0 %570, %v472
        %v572 = vpop.permute.xlu0 %571
        %575 = vset.pattern.permute.xlu0 0
        %576 = vperm.xlu0 %575, %v473
        %v577 = vpop.permute.xlu0 %576
        %580 = vset.pattern.permute.xlu0 0
        %581 = vperm.xlu0 %580, %v474
        %v582 = vpop.permute.xlu0 %581
        %585 = vset.pattern.permute.xlu0 0
        %586 = vperm.xlu0 %585, %v475
        %v587 = vpop.permute.xlu0 %586
        %590 = vset.pattern.permute.xlu0 0
        %591 = vperm.xlu0 %590, %v476
        %v592 = vpop.permute.xlu0 %591
        %595 = vset.pattern.permute.xlu0 0
        %596 = vperm.xlu0 %595, %v477
        %v597 = vpop.permute.xlu0 %596
        %600 = vset.pattern.permute.xlu0 0
        %601 = vperm.xlu0 %600, %v478
        %v602 = vpop.permute.xlu0 %601
        %v654 = vunpack.c.l.b16 %v404
        %v655 = vunpack.c.h.b16 %v404
        %v656 = vunpack.c.l.b16 %v405
        %v657 = vunpack.c.l.b16 %v406
        %v658 = vunpack.c.h.b16 %v406
        %v659 = vunpack.c.l.b16 %v407
        %v660 = vunpack.c.l.b16 %v408
        %v661 = vunpack.c.h.b16 %v408
        %v662 = vunpack.c.l.b16 %v409
        %v663 = vunpack.c.l.b16 %v410
        %v664 = vunpack.c.h.b16 %v410
        %v665 = vunpack.c.l.b16 %v411
        %v666 = vunpack.c.l.b16 %v412
        %v667 = vunpack.c.h.b16 %v412
        %v668 = vunpack.c.l.b16 %v413
        %v669 = vunpack.c.l.b16 %v414
        %v670 = vunpack.c.h.b16 %v414
        %v671 = vunpack.c.l.b16 %v415
        %v672 = vunpack.c.l.b16 %v416
        %v673 = vunpack.c.h.b16 %v416
        %v674 = vunpack.c.l.b16 %v417
        %v675 = vunpack.c.l.b16 %v418
        %v676 = vunpack.c.h.b16 %v418
        %v677 = vunpack.c.l.b16 %v419
        %v678 = vunpack.c.l.b16 %v420
        %v679 = vunpack.c.h.b16 %v420
        %v680 = vunpack.c.l.b16 %v421
        %v681 = vunpack.c.l.b16 %v422
        %v682 = vunpack.c.h.b16 %v422
        %v683 = vunpack.c.l.b16 %v423
        %v684 = vunpack.c.l.b16 %v424
        %v685 = vunpack.c.h.b16 %v424
        %v686 = vunpack.c.l.b16 %v425
        %v687 = vunpack.c.l.b16 %v426
        %v688 = vunpack.c.h.b16 %v426
        %v689 = vunpack.c.l.b16 %v427
        %v690 = vunpack.c.l.b16 %v428
        %v691 = vunpack.c.h.b16 %v428
        %v692 = vunpack.c.l.b16 %v429
        %v693 = vunpack.c.l.b16 %v430
        %v694 = vunpack.c.h.b16 %v430
        %v695 = vunpack.c.l.b16 %v431
        %v696 = vunpack.c.l.b16 %v432
        %v697 = vunpack.c.h.b16 %v432
        %v698 = vunpack.c.l.b16 %v433
        %v699 = vunpack.c.l.b16 %v434
        %v700 = vunpack.c.h.b16 %v434
        %v701 = vunpack.c.l.b16 %v435
        %v702 = vunpack.c.l.b16 %v436
        %v703 = vunpack.c.h.b16 %v436
        %v704 = vunpack.c.l.b16 %v437
        %v705 = vunpack.c.l.b16 %v438
        %v706 = vunpack.c.h.b16 %v438
        %v707 = vunpack.c.l.b16 %v439
        %v708 = vunpack.c.l.b16 %v440
        %v709 = vunpack.c.h.b16 %v440
        %v710 = vunpack.c.l.b16 %v441
        %v711 = vunpack.c.l.b16 %v442
        %v712 = vunpack.c.h.b16 %v442
        %v713 = vunpack.c.l.b16 %v443
        %v714 = vunpack.c.l.b16 %v444
        %v715 = vunpack.c.h.b16 %v444
        %v716 = vunpack.c.l.b16 %v445
        %v717 = vunpack.c.l.b16 %v446
        %v718 = vunpack.c.h.b16 %v446
        %v719 = vunpack.c.l.b16 %v447
        %v720 = vunpack.c.l.b16 %v448
        %v721 = vunpack.c.h.b16 %v448
        %v722 = vunpack.c.l.b16 %v449
        %v723 = vunpack.c.l.b16 %v450
        %v724 = vunpack.c.h.b16 %v450
        %v725 = vunpack.c.l.b16 %v451
        %v726 = vunpack.c.l.b16 %v452
        %v727 = vunpack.c.h.b16 %v452
        %v728 = vunpack.c.l.b16 %v453
        %v729 = vpack.c.b16 %v657, %v654
        %v730 = vpack.c.b16 %v658, %v655
        %v731 = vpack.c.b16 %v659, %v656
        %v732 = vpack.c.b16 %v663, %v660
        %v733 = vpack.c.b16 %v664, %v661
        %v734 = vpack.c.b16 %v665, %v662
        %v735 = vpack.c.b16 %v669, %v666
        %v736 = vpack.c.b16 %v670, %v667
        %v737 = vpack.c.b16 %v671, %v668
        %v738 = vpack.c.b16 %v675, %v672
        %v739 = vpack.c.b16 %v676, %v673
        %v740 = vpack.c.b16 %v677, %v674
        %v741 = vpack.c.b16 %v681, %v678
        %v742 = vpack.c.b16 %v682, %v679
        %v743 = vpack.c.b16 %v683, %v680
        %v744 = vpack.c.b16 %v687, %v684
        %v745 = vpack.c.b16 %v688, %v685
        %v746 = vpack.c.b16 %v689, %v686
        %v747 = vpack.c.b16 %v693, %v690
        %v748 = vpack.c.b16 %v694, %v691
        %v749 = vpack.c.b16 %v695, %v692
        %v750 = vpack.c.b16 %v699, %v696
        %v751 = vpack.c.b16 %v700, %v697
        %v752 = vpack.c.b16 %v701, %v698
        %v753 = vpack.c.b16 %v705, %v702
        %v754 = vpack.c.b16 %v706, %v703
        %v755 = vpack.c.b16 %v707, %v704
        %v756 = vpack.c.b16 %v711, %v708
        %v757 = vpack.c.b16 %v712, %v709
        %v758 = vpack.c.b16 %v713, %v710
        %v759 = vpack.c.b16 %v717, %v714
        %v760 = vpack.c.b16 %v718, %v715
        %v761 = vpack.c.b16 %v719, %v716
        %v762 = vpack.c.b16 %v723, %v720
        %v763 = vpack.c.b16 %v724, %v721
        %v764 = vpack.c.b16 %v725, %v722
        %v765 = vpack.c.b16 %v726, %v726
        %v766 = vpack.c.b16 %v727, %v727
        %v767 = vpack.c.b16 %v728, %v728
        %v855 = vunpack.c.l.b16 %v356
        %v856 = vunpack.c.h.b16 %v356
        %v857 = vunpack.c.l.b16 %v357
        %v858 = vunpack.c.h.b16 %v357
        %v859 = vunpack.c.l.b16 %v358
        %v860 = vunpack.c.h.b16 %v358
        %v861 = vunpack.c.l.b16 %v359
        %v862 = vunpack.c.h.b16 %v359
        %v863 = vunpack.c.l.b16 %v360
        %v864 = vunpack.c.h.b16 %v360
        %v865 = vunpack.c.l.b16 %v361
        %v866 = vunpack.c.h.b16 %v361
        %v867 = vunpack.c.l.b16 %v362
        %v868 = vunpack.c.h.b16 %v362
        %v869 = vunpack.c.l.b16 %v363
        %v870 = vunpack.c.h.b16 %v363
        %v871 = vunpack.c.l.b16 %v364
        %v872 = vunpack.c.h.b16 %v364
        %v873 = vunpack.c.l.b16 %v365
        %v874 = vunpack.c.h.b16 %v365
        %v875 = vunpack.c.l.b16 %v366
        %v876 = vunpack.c.h.b16 %v366
        %v877 = vunpack.c.l.b16 %v367
        %v878 = vunpack.c.h.b16 %v367
        %v879 = vunpack.c.l.b16 %v368
        %v880 = vunpack.c.h.b16 %v368
        %v881 = vunpack.c.l.b16 %v369
        %v882 = vunpack.c.h.b16 %v369
        %v883 = vunpack.c.l.b16 %v370
        %v884 = vunpack.c.h.b16 %v370
        %v885 = vunpack.c.l.b16 %v371
        %v886 = vunpack.c.h.b16 %v371
        %v887 = vunpack.c.l.b16 %v372
        %v888 = vunpack.c.h.b16 %v372
        %v889 = vunpack.c.l.b16 %v373
        %v890 = vunpack.c.h.b16 %v373
        %v891 = vunpack.c.l.b16 %v374
        %v892 = vunpack.c.h.b16 %v374
        %v893 = vunpack.c.l.b16 %v375
        %v894 = vunpack.c.h.b16 %v375
        %v895 = vunpack.c.l.b16 %v376
        %v896 = vunpack.c.h.b16 %v376
        %v897 = vunpack.c.l.b16 %v377
        %v898 = vunpack.c.h.b16 %v377
        %v899 = vunpack.c.l.b16 %v378
        %v900 = vunpack.c.h.b16 %v378
        %v901 = vunpack.c.l.b16 %v379
        %v902 = vunpack.c.h.b16 %v379
        %v903 = vunpack.c.l.b16 %v380
        %v904 = vunpack.c.h.b16 %v380
        %v905 = vunpack.c.l.b16 %v381
        %v906 = vunpack.c.h.b16 %v381
        %v907 = vunpack.c.l.b16 %v382
        %v908 = vunpack.c.h.b16 %v382
        %v909 = vunpack.c.l.b16 %v383
        %v910 = vunpack.c.h.b16 %v383
        %v911 = vunpack.c.l.b16 %v384
        %v912 = vunpack.c.h.b16 %v384
        %v913 = vunpack.c.l.b16 %v385
        %v914 = vunpack.c.h.b16 %v385
        %v915 = vunpack.c.l.b16 %v386
        %v916 = vunpack.c.h.b16 %v386
        %v917 = vunpack.c.l.b16 %v387
        %v918 = vunpack.c.h.b16 %v387
        %v919 = vunpack.c.l.b16 %v388
        %v920 = vunpack.c.h.b16 %v388
        %v921 = vunpack.c.l.b16 %v389
        %v922 = vunpack.c.h.b16 %v389
        %v923 = vunpack.c.l.b16 %v390
        %v924 = vunpack.c.h.b16 %v390
        %v925 = vunpack.c.l.b16 %v391
        %v926 = vunpack.c.h.b16 %v391
        %v927 = vunpack.c.l.b16 %v392
        %v928 = vunpack.c.h.b16 %v392
        %v929 = vunpack.c.l.b16 %v393
        %v930 = vunpack.c.h.b16 %v393
        %v931 = vunpack.c.l.b16 %v394
        %v932 = vunpack.c.h.b16 %v394
        %v933 = vunpack.c.l.b16 %v395
        %v934 = vunpack.c.h.b16 %v395
        %v935 = vunpack.c.l.b16 %v396
        %v936 = vunpack.c.h.b16 %v396
        %v937 = vunpack.c.l.b16 %v397
        %v938 = vunpack.c.h.b16 %v397
        %v939 = vunpack.c.l.b16 %v398
        %v940 = vunpack.c.h.b16 %v398
        %v941 = vunpack.c.l.b16 %v399
        %v942 = vunpack.c.h.b16 %v399
        %v943 = vunpack.c.l.b16 %v400
        %v944 = vunpack.c.h.b16 %v400
        %v945 = vunpack.c.l.b16 %v401
        %v946 = vunpack.c.h.b16 %v401
        %v947 = vunpack.c.l.b16 %v402
        %v948 = vunpack.c.h.b16 %v402
        %v949 = vunpack.c.l.b16 %v403
        %v950 = vunpack.c.h.b16 %v403
        %v951 = vpack.c.b16 %v857, %v855
        %v952 = vpack.c.b16 %v858, %v856
        %v953 = vpack.c.b16 %v861, %v859
        %v954 = vpack.c.b16 %v862, %v860
        %v955 = vpack.c.b16 %v865, %v863
        %v956 = vpack.c.b16 %v866, %v864
        %v957 = vpack.c.b16 %v869, %v867
        %v958 = vpack.c.b16 %v870, %v868
        %v959 = vpack.c.b16 %v873, %v871
        %v960 = vpack.c.b16 %v874, %v872
        %v961 = vpack.c.b16 %v877, %v875
        %v962 = vpack.c.b16 %v878, %v876
        %v963 = vpack.c.b16 %v881, %v879
        %v964 = vpack.c.b16 %v882, %v880
        %v965 = vpack.c.b16 %v885, %v883
        %v966 = vpack.c.b16 %v886, %v884
        %v967 = vpack.c.b16 %v889, %v887
        %v968 = vpack.c.b16 %v890, %v888
        %v969 = vpack.c.b16 %v893, %v891
        %v970 = vpack.c.b16 %v894, %v892
        %v971 = vpack.c.b16 %v897, %v895
        %v972 = vpack.c.b16 %v898, %v896
        %v973 = vpack.c.b16 %v901, %v899
        %v974 = vpack.c.b16 %v902, %v900
        %v975 = vpack.c.b16 %v905, %v903
        %v976 = vpack.c.b16 %v906, %v904
        %v977 = vpack.c.b16 %v909, %v907
        %v978 = vpack.c.b16 %v910, %v908
        %v979 = vpack.c.b16 %v913, %v911
        %v980 = vpack.c.b16 %v914, %v912
        %v981 = vpack.c.b16 %v917, %v915
        %v982 = vpack.c.b16 %v918, %v916
        %v983 = vpack.c.b16 %v921, %v919
        %v984 = vpack.c.b16 %v922, %v920
        %v985 = vpack.c.b16 %v925, %v923
        %v986 = vpack.c.b16 %v926, %v924
        %v987 = vpack.c.b16 %v929, %v927
        %v988 = vpack.c.b16 %v930, %v928
        %v989 = vpack.c.b16 %v933, %v931
        %v990 = vpack.c.b16 %v934, %v932
        %v991 = vpack.c.b16 %v937, %v935
        %v992 = vpack.c.b16 %v938, %v936
        %v993 = vpack.c.b16 %v941, %v939
        %v994 = vpack.c.b16 %v942, %v940
        %v995 = vpack.c.b16 %v945, %v943
        %v996 = vpack.c.b16 %v946, %v944
        %v997 = vpack.c.b16 %v949, %v947
        %v998 = vpack.c.b16 %v950, %v948
        %1047 = vmatprep.subr.bf16.mxu0 %v966
        %1048 = vmatpush1.bf16.msra.mxu0 %v965
        %1049 = vmatprep.subr.bf16.mxu0 %v964
        %1050 = vmatpush1.bf16.msra.mxu0 %v963
        %1051 = vmatprep.subr.bf16.mxu0 %v962
        %1052 = vmatpush1.bf16.msra.mxu0 %v961
        %1053 = vmatprep.subr.bf16.mxu0 %v960
        %1054 = vmatpush1.bf16.msra.mxu0 %v959
        %1055 = vmatprep.subr.bf16.mxu0 %v958
        %1056 = vmatpush1.bf16.msra.mxu0 %v957
        %1057 = vmatprep.subr.bf16.mxu0 %v956
        %1058 = vmatpush1.bf16.msra.mxu0 %v955
        %1059 = vmatprep.subr.bf16.mxu0 %v954
        %1060 = vmatpush1.bf16.msra.mxu0 %v953
        %1061 = vmatprep.subr.bf16.mxu0 %v952
        %1062 = vmatpush1.bf16.msra.mxu0 %v951
        %1063 = vmatprep.subr.bf16.mxu0 %v982
        %1064 = vmatpush2.bf16.msra.mxu0 %v981
        %1065 = vmatprep.subr.bf16.mxu0 %v980
        %1066 = vmatpush2.bf16.msra.mxu0 %v979
        %1067 = vmatprep.subr.bf16.mxu0 %v978
        %1068 = vmatpush2.bf16.msra.mxu0 %v977
        %1069 = vmatprep.subr.bf16.mxu0 %v976
        %1070 = vmatpush2.bf16.msra.mxu0 %v975
        %1071 = vmatprep.subr.bf16.mxu0 %v974
        %1072 = vmatpush2.bf16.msra.mxu0 %v973
        %1073 = vmatprep.subr.bf16.mxu0 %v972
        %1074 = vmatpush2.bf16.msra.mxu0 %v971
        %1075 = vmatprep.subr.bf16.mxu0 %v970
        %1076 = vmatpush2.bf16.msra.mxu0 %v969
        %1077 = vmatprep.subr.bf16.mxu0 %v968
        %1078 = vmatpush2.bf16.msra.mxu0 %v967
        %1079 = vmatprep.mubr.bf16.mxu0 %v730
        %1080 = vmatmul.mubr.bf16.gmra.mxu0 %v729
        %v1081 = vpop.f32.mrf.mxu0
        %v1082 = vadd.f32 %v482, %v1081
        %v1083 = vpop.f32.mrf.mxu0
        %v1084 = vadd.f32 %v482, %v1083
        %v1085 = vpop.f32.mrf.mxu0
        %v1086 = vadd.f32 %v487, %v1085
        %v1087 = vpop.f32.mrf.mxu0
        %v1088 = vadd.f32 %v487, %v1087
        %1089 = vmatprep.mubr.bf16.mxu0 %v733
        %1090 = vmatmul.mubr.bf16.gmra.mxu0 %v732
        %v1091 = vpop.f32.mrf.mxu0
        %v1092 = vadd.f32 %v492, %v1091
        %v1093 = vpop.f32.mrf.mxu0
        %v1094 = vadd.f32 %v492, %v1093
        %v1095 = vpop.f32.mrf.mxu0
        %v1096 = vadd.f32 %v497, %v1095
        %v1097 = vpop.f32.mrf.mxu0
        %v1098 = vadd.f32 %v497, %v1097
        %1099 = vmatprep.mubr.bf16.mxu0 %v736
        %1100 = vmatmul.mubr.bf16.gmra.mxu0 %v735
        %v1101 = vpop.f32.mrf.mxu0
        %v1102 = vadd.f32 %v502, %v1101
        %v1103 = vpop.f32.mrf.mxu0
        %v1104 = vadd.f32 %v502, %v1103
        %v1105 = vpop.f32.mrf.mxu0
        %v1106 = vadd.f32 %v507, %v1105
        %v1107 = vpop.f32.mrf.mxu0
        %v1108 = vadd.f32 %v507, %v1107
        %1109 = vmatprep.mubr.bf16.mxu0 %v739
        %1110 = vmatmul.mubr.bf16.gmra.mxu0 %v738
        %v1111 = vpop.f32.mrf.mxu0
        %v1112 = vadd.f32 %v512, %v1111
        %v1113 = vpop.f32.mrf.mxu0
        %v1114 = vadd.f32 %v512, %v1113
        %v1115 = vpop.f32.mrf.mxu0
        %v1116 = vadd.f32 %v517, %v1115
        %v1117 = vpop.f32.mrf.mxu0
        %v1118 = vadd.f32 %v517, %v1117
        %1119 = vmatprep.mubr.bf16.mxu0 %v742
        %1120 = vmatmul.mubr.bf16.gmra.mxu0 %v741
        %v1121 = vpop.f32.mrf.mxu0
        %v1122 = vadd.f32 %v522, %v1121
        %v1123 = vpop.f32.mrf.mxu0
        %v1124 = vadd.f32 %v522, %v1123
        %v1125 = vpop.f32.mrf.mxu0
        %v1126 = vadd.f32 %v527, %v1125
        %v1127 = vpop.f32.mrf.mxu0
        %v1128 = vadd.f32 %v527, %v1127
        %1129 = vmatprep.mubr.bf16.mxu0 %v745
        %1130 = vmatmul.mubr.bf16.gmra.mxu0 %v744
        %v1131 = vpop.f32.mrf.mxu0
        %v1132 = vadd.f32 %v532, %v1131
        %v1133 = vpop.f32.mrf.mxu0
        %v1134 = vadd.f32 %v532, %v1133
        %v1135 = vpop.f32.mrf.mxu0
        %v1136 = vadd.f32 %v537, %v1135
        %v1137 = vpop.f32.mrf.mxu0
        %v1138 = vadd.f32 %v537, %v1137
        %1139 = vmatprep.mubr.bf16.mxu0 %v748
        %1140 = vmatmul.mubr.bf16.gmra.mxu0 %v747
        %v1141 = vpop.f32.mrf.mxu0
        %v1142 = vadd.f32 %v542, %v1141
        %v1143 = vpop.f32.mrf.mxu0
        %v1144 = vadd.f32 %v542, %v1143
        %v1145 = vpop.f32.mrf.mxu0
        %v1146 = vadd.f32 %v547, %v1145
        %v1147 = vpop.f32.mrf.mxu0
        %v1148 = vadd.f32 %v547, %v1147
        %1149 = vmatprep.mubr.bf16.mxu0 %v751
        %1150 = vmatmul.mubr.bf16.gmra.mxu0 %v750
        %v1151 = vpop.f32.mrf.mxu0
        %v1152 = vadd.f32 %v552, %v1151
        %v1153 = vpop.f32.mrf.mxu0
        %v1154 = vadd.f32 %v552, %v1153
        %v1155 = vpop.f32.mrf.mxu0
        %v1156 = vadd.f32 %v557, %v1155
        %v1157 = vpop.f32.mrf.mxu0
        %v1158 = vadd.f32 %v557, %v1157
        %1159 = vmatprep.mubr.bf16.mxu0 %v754
        %1160 = vmatmul.mubr.bf16.gmra.mxu0 %v753
        %v1161 = vpop.f32.mrf.mxu0
        %v1162 = vadd.f32 %v562, %v1161
        %v1163 = vpop.f32.mrf.mxu0
        %v1164 = vadd.f32 %v562, %v1163
        %v1165 = vpop.f32.mrf.mxu0
        %v1166 = vadd.f32 %v567, %v1165
        %v1167 = vpop.f32.mrf.mxu0
        %v1168 = vadd.f32 %v567, %v1167
        %1169 = vmatprep.mubr.bf16.mxu0 %v757
        %1170 = vmatmul.mubr.bf16.gmra.mxu0 %v756
        %v1171 = vpop.f32.mrf.mxu0
        %v1172 = vadd.f32 %v572, %v1171
        %v1173 = vpop.f32.mrf.mxu0
        %v1174 = vadd.f32 %v572, %v1173
        %v1175 = vpop.f32.mrf.mxu0
        %v1176 = vadd.f32 %v577, %v1175
        %v1177 = vpop.f32.mrf.mxu0
        %v1178 = vadd.f32 %v577, %v1177
        %1179 = vmatprep.mubr.bf16.mxu0 %v760
        %1180 = vmatmul.mubr.bf16.gmra.mxu0 %v759
        %v1181 = vpop.f32.mrf.mxu0
        %v1182 = vadd.f32 %v582, %v1181
        %v1183 = vpop.f32.mrf.mxu0
        %v1184 = vadd.f32 %v582, %v1183
        %v1185 = vpop.f32.mrf.mxu0
        %v1186 = vadd.f32 %v587, %v1185
        %v1187 = vpop.f32.mrf.mxu0
        %v1188 = vadd.f32 %v587, %v1187
        %1189 = vmatprep.mubr.bf16.mxu0 %v763
        %1190 = vmatmul.mubr.bf16.gmra.mxu0 %v762
        %v1191 = vpop.f32.mrf.mxu0
        %v1192 = vadd.f32 %v592, %v1191
        %v1193 = vpop.f32.mrf.mxu0
        %v1194 = vadd.f32 %v592, %v1193
        %v1195 = vpop.f32.mrf.mxu0
        %v1196 = vadd.f32 %v597, %v1195
        %v1197 = vpop.f32.mrf.mxu0
        %v1198 = vadd.f32 %v597, %v1197
        %1199 = vmatprep.mubr.bf16.mxu0 %v766
        %1200 = vmatmul.mubr.bf16.gmra.mxu0 %v765
        %v1201 = vpop.f32.mrf.mxu0
        %v1202 = vadd.f32 %v602, %v1201
        %v1203 = vpop.f32.mrf.mxu0
        %v1204 = vadd.f32 %v602, %v1203
        %v1205 = vpop.f32.mrf.mxu0
        %v1206 = vpop.f32.mrf.mxu0
        %1207 = vdwg.mxu0
        %1208 = vmatprep.subr.bf16.mxu0 %v998
        %1209 = vmatpush1.bf16.msra.mxu0 %v997
        %1210 = vmatprep.subr.bf16.mxu0 %v996
        %1211 = vmatpush1.bf16.msra.mxu0 %v995
        %1212 = vmatprep.subr.bf16.mxu0 %v994
        %1213 = vmatpush1.bf16.msra.mxu0 %v993
        %1214 = vmatprep.subr.bf16.mxu0 %v992
        %1215 = vmatpush1.bf16.msra.mxu0 %v991
        %1216 = vmatprep.subr.bf16.mxu0 %v990
        %1217 = vmatpush1.bf16.msra.mxu0 %v989
        %1218 = vmatprep.subr.bf16.mxu0 %v988
        %1219 = vmatpush1.bf16.msra.mxu0 %v987
        %1220 = vmatprep.subr.bf16.mxu0 %v986
        %1221 = vmatpush1.bf16.msra.mxu0 %v985
        %1222 = vmatprep.subr.bf16.mxu0 %v984
        %1223 = vmatpush1.bf16.msra.mxu0 %v983
        %1224 = vmatprep.subr.bf16.mxu0 0
        %1225 = vmatpush2.bf16.msra.mxu0 0
        %1226 = vmatprep.subr.bf16.mxu0 0
        %1227 = vmatpush2.bf16.msra.mxu0 0
        %1228 = vmatprep.subr.bf16.mxu0 0
        %1229 = vmatpush2.bf16.msra.mxu0 0
        %1230 = vmatprep.subr.bf16.mxu0 0
        %1231 = vmatpush2.bf16.msra.mxu0 0
        %1232 = vmatprep.subr.bf16.mxu0 0
        %1233 = vmatpush2.bf16.msra.mxu0 0
        %1234 = vmatprep.subr.bf16.mxu0 0
        %1235 = vmatpush2.bf16.msra.mxu0 0
        %1236 = vmatprep.subr.bf16.mxu0 0
        %1237 = vmatpush2.bf16.msra.mxu0 0
        %1238 = vmatprep.subr.bf16.mxu0 0
        %1239 = vmatpush2.bf16.msra.mxu0 0
        %1240 = vmatprep.mubr.bf16.mxu0 0
        %1241 = vmatmul.mubr.bf16.gmra.mxu0 %v731
        %v1242 = vpop.f32.mrf.mxu0
        %v1243 = vadd.f32 %v1082, %v1242
        %v1244 = vpop.f32.mrf.mxu0
        %v1245 = vadd.f32 %v1084, %v1244
        %v1246 = vpop.f32.mrf.mxu0
        %v1247 = vadd.f32 %v1086, %v1246
        %v1248 = vpop.f32.mrf.mxu0
        %v1249 = vadd.f32 %v1088, %v1248
        %1250 = vmatprep.mubr.bf16.mxu0 0
        %1251 = vmatmul.mubr.bf16.gmra.mxu0 %v734
        %v1252 = vpop.f32.mrf.mxu0
        %v1253 = vadd.f32 %v1092, %v1252
        %v1254 = vpop.f32.mrf.mxu0
        %v1255 = vadd.f32 %v1094, %v1254
        %v1256 = vpop.f32.mrf.mxu0
        %v1257 = vadd.f32 %v1096, %v1256
        %v1258 = vpop.f32.mrf.mxu0
        %v1259 = vadd.f32 %v1098, %v1258
        %1260 = vmatprep.mubr.bf16.mxu0 0
        %1261 = vmatmul.mubr.bf16.gmra.mxu0 %v737
        %v1262 = vpop.f32.mrf.mxu0
        %v1263 = vadd.f32 %v1102, %v1262
        %v1264 = vpop.f32.mrf.mxu0
        %v1265 = vadd.f32 %v1104, %v1264
        %v1266 = vpop.f32.mrf.mxu0
        %v1267 = vadd.f32 %v1106, %v1266
        %v1268 = vpop.f32.mrf.mxu0
        %v1269 = vadd.f32 %v1108, %v1268
        %1270 = vmatprep.mubr.bf16.mxu0 0
        %1271 = vmatmul.mubr.bf16.gmra.mxu0 %v740
        %v1272 = vpop.f32.mrf.mxu0
        %v1273 = vadd.f32 %v1112, %v1272
        %v1274 = vpop.f32.mrf.mxu0
        %v1275 = vadd.f32 %v1114, %v1274
        %v1276 = vpop.f32.mrf.mxu0
        %v1277 = vadd.f32 %v1116, %v1276
        %v1278 = vpop.f32.mrf.mxu0
        %v1279 = vadd.f32 %v1118, %v1278
        %1280 = vmatprep.mubr.bf16.mxu0 0
        %1281 = vmatmul.mubr.bf16.gmra.mxu0 %v743
        %v1282 = vpop.f32.mrf.mxu0
        %v1283 = vadd.f32 %v1122, %v1282
        %v1284 = vpop.f32.mrf.mxu0
        %v1285 = vadd.f32 %v1124, %v1284
        %v1286 = vpop.f32.mrf.mxu0
        %v1287 = vadd.f32 %v1126, %v1286
        %v1288 = vpop.f32.mrf.mxu0
        %v1289 = vadd.f32 %v1128, %v1288
        %1290 = vmatprep.mubr.bf16.mxu0 0
        %1291 = vmatmul.mubr.bf16.gmra.mxu0 %v746
        %v1292 = vpop.f32.mrf.mxu0
        %v1293 = vadd.f32 %v1132, %v1292
        %v1294 = vpop.f32.mrf.mxu0
        %v1295 = vadd.f32 %v1134, %v1294
        %v1296 = vpop.f32.mrf.mxu0
        %v1297 = vadd.f32 %v1136, %v1296
        %v1298 = vpop.f32.mrf.mxu0
        %v1299 = vadd.f32 %v1138, %v1298
        %1300 = vmatprep.mubr.bf16.mxu0 0
        %1301 = vmatmul.mubr.bf16.gmra.mxu0 %v749
        %v1302 = vpop.f32.mrf.mxu0
        %v1303 = vadd.f32 %v1142, %v1302
        %v1304 = vpop.f32.mrf.mxu0
        %v1305 = vadd.f32 %v1144, %v1304
        %v1306 = vpop.f32.mrf.mxu0
        %v1307 = vadd.f32 %v1146, %v1306
        %v1308 = vpop.f32.mrf.mxu0
        %v1309 = vadd.f32 %v1148, %v1308
        %1310 = vmatprep.mubr.bf16.mxu0 0
        %1311 = vmatmul.mubr.bf16.gmra.mxu0 %v752
        %v1312 = vpop.f32.mrf.mxu0
        %v1313 = vadd.f32 %v1152, %v1312
        %v1314 = vpop.f32.mrf.mxu0
        %v1315 = vadd.f32 %v1154, %v1314
        %v1316 = vpop.f32.mrf.mxu0
        %v1317 = vadd.f32 %v1156, %v1316
        %v1318 = vpop.f32.mrf.mxu0
        %v1319 = vadd.f32 %v1158, %v1318
        %1320 = vmatprep.mubr.bf16.mxu0 0
        %1321 = vmatmul.mubr.bf16.gmra.mxu0 %v755
        %v1322 = vpop.f32.mrf.mxu0
        %v1323 = vadd.f32 %v1162, %v1322
        %v1324 = vpop.f32.mrf.mxu0
        %v1325 = vadd.f32 %v1164, %v1324
        %v1326 = vpop.f32.mrf.mxu0
        %v1327 = vadd.f32 %v1166, %v1326
        %v1328 = vpop.f32.mrf.mxu0
        %v1329 = vadd.f32 %v1168, %v1328
        %1330 = vmatprep.mubr.bf16.mxu0 0
        %1331 = vmatmul.mubr.bf16.gmra.mxu0 %v758
        %v1332 = vpop.f32.mrf.mxu0
        %v1333 = vadd.f32 %v1172, %v1332
        %v1334 = vpop.f32.mrf.mxu0
        %v1335 = vadd.f32 %v1174, %v1334
        %v1336 = vpop.f32.mrf.mxu0
        %v1337 = vadd.f32 %v1176, %v1336
        %v1338 = vpop.f32.mrf.mxu0
        %v1339 = vadd.f32 %v1178, %v1338
        %1340 = vmatprep.mubr.bf16.mxu0 0
        %1341 = vmatmul.mubr.bf16.gmra.mxu0 %v761
        %v1342 = vpop.f32.mrf.mxu0
        %v1343 = vadd.f32 %v1182, %v1342
        %v1344 = vpop.f32.mrf.mxu0
        %v1345 = vadd.f32 %v1184, %v1344
        %v1346 = vpop.f32.mrf.mxu0
        %v1347 = vadd.f32 %v1186, %v1346
        %v1348 = vpop.f32.mrf.mxu0
        %v1349 = vadd.f32 %v1188, %v1348
        %1350 = vmatprep.mubr.bf16.mxu0 0
        %1351 = vmatmul.mubr.bf16.gmra.mxu0 %v764
        %v1352 = vpop.f32.mrf.mxu0
        %v1353 = vadd.f32 %v1192, %v1352
        %v1354 = vpop.f32.mrf.mxu0
        %v1355 = vadd.f32 %v1194, %v1354
        %v1356 = vpop.f32.mrf.mxu0
        %v1357 = vadd.f32 %v1196, %v1356
        %v1358 = vpop.f32.mrf.mxu0
        %v1359 = vadd.f32 %v1198, %v1358
        %1360 = vmatprep.mubr.bf16.mxu0 0
        %1361 = vmatmul.mubr.bf16.gmra.mxu0 %v767
        %v1362 = vpop.f32.mrf.mxu0
        %v1363 = vadd.f32 %v1202, %v1362
        %v1364 = vpop.f32.mrf.mxu0
        %v1365 = vadd.f32 %v1204, %v1364
        %v1366 = vpop.f32.mrf.mxu0
        %v1367 = vpop.f32.mrf.mxu0
        %1368 = vdwg.mxu0
        %v1369 = vmax.f32 %v1243, 0.0
        %v1370 = vmax.f32 %v1245, 0.0
        %v1371 = vmax.f32 %v1247, 0.0
        %v1372 = vmax.f32 %v1249, 0.0
        %v1373 = vmax.f32 %v1253, 0.0
        %v1374 = vmax.f32 %v1255, 0.0
        %v1375 = vmax.f32 %v1257, 0.0
        %v1376 = vmax.f32 %v1259, 0.0
        %v1377 = vmax.f32 %v1263, 0.0
        %v1378 = vmax.f32 %v1265, 0.0
        %v1379 = vmax.f32 %v1267, 0.0
        %v1380 = vmax.f32 %v1269, 0.0
        %v1381 = vmax.f32 %v1273, 0.0
        %v1382 = vmax.f32 %v1275, 0.0
        %v1383 = vmax.f32 %v1277, 0.0
        %v1384 = vmax.f32 %v1279, 0.0
        %v1385 = vmax.f32 %v1283, 0.0
        %v1386 = vmax.f32 %v1285, 0.0
        %v1387 = vmax.f32 %v1287, 0.0
        %v1388 = vmax.f32 %v1289, 0.0
        %v1389 = vmax.f32 %v1293, 0.0
        %v1390 = vmax.f32 %v1295, 0.0
        %v1391 = vmax.f32 %v1297, 0.0
        %v1392 = vmax.f32 %v1299, 0.0
        %v1393 = vmax.f32 %v1303, 0.0
        %v1394 = vmax.f32 %v1305, 0.0
        %v1395 = vmax.f32 %v1307, 0.0
        %v1396 = vmax.f32 %v1309, 0.0
        %v1397 = vmax.f32 %v1313, 0.0
        %v1398 = vmax.f32 %v1315, 0.0
        %v1399 = vmax.f32 %v1317, 0.0
        %v1400 = vmax.f32 %v1319, 0.0
        %v1401 = vmax.f32 %v1323, 0.0
        %v1402 = vmax.f32 %v1325, 0.0
        %v1403 = vmax.f32 %v1327, 0.0
        %v1404 = vmax.f32 %v1329, 0.0
        %v1405 = vmax.f32 %v1333, 0.0
        %v1406 = vmax.f32 %v1335, 0.0
        %v1407 = vmax.f32 %v1337, 0.0
        %v1408 = vmax.f32 %v1339, 0.0
        %v1409 = vmax.f32 %v1343, 0.0
        %v1410 = vmax.f32 %v1345, 0.0
        %v1411 = vmax.f32 %v1347, 0.0
        %v1412 = vmax.f32 %v1349, 0.0
        %v1413 = vmax.f32 %v1353, 0.0
        %v1414 = vmax.f32 %v1355, 0.0
        %v1415 = vmax.f32 %v1357, 0.0
        %v1416 = vmax.f32 %v1359, 0.0
        %v1417 = vmax.f32 %v1363, 0.0
        %v1418 = vmax.f32 %v1365, 0.0
        %v1419 = vld [vmem:[%s3] sm:$0xff]
        %v1420 = vld [vmem:[%s3 + $0x8] sm:$0xff]
        %v1421 = vld [vmem:[%s3 + $0x10] sm:$0xff]
        %v1422 = vld [vmem:[%s3 + $0x18] sm:$0xff]
        %v1423 = vld [vmem:[%s3 + $0x20] sm:$0xff]
        %v1424 = vld [vmem:[%s3 + $0x28] sm:$0xff]
        %v1425 = vld [vmem:[%s3 + $0x30] sm:$0xff]
        %v1426 = vld [vmem:[%s3 + $0x38] sm:$0xff]
        %v1427 = vld [vmem:[%s3 + $0x40] sm:$0xff]
        %v1428 = vld [vmem:[%s3 + $0x48] sm:$0xff]
        %v1429 = vld [vmem:[%s3 + $0x50] sm:$0xff]
        %v1430 = vld [vmem:[%s3 + $0x58] sm:$0xff]
        %v1431 = vld [vmem:[%s3 + $0x60] sm:$0x33]
        %v1432 = vpack.c.bf16 %v1371, %v1369
        %v1433 = vpack.c.bf16 %v1372, %v1370
        %v1434 = vpack.c.bf16 %v1375, %v1373
        %v1435 = vpack.c.bf16 %v1376, %v1374
        %v1436 = vpack.c.bf16 %v1379, %v1377
        %v1437 = vpack.c.bf16 %v1380, %v1378
        %v1438 = vpack.c.bf16 %v1383, %v1381
        %v1439 = vpack.c.bf16 %v1384, %v1382
        %v1440 = vpack.c.bf16 %v1387, %v1385
        %v1441 = vpack.c.bf16 %v1388, %v1386
        %v1442 = vpack.c.bf16 %v1391, %v1389
        %v1443 = vpack.c.bf16 %v1392, %v1390
        %v1444 = vpack.c.bf16 %v1395, %v1393
        %v1445 = vpack.c.bf16 %v1396, %v1394
        %v1446 = vpack.c.bf16 %v1399, %v1397
        %v1447 = vpack.c.bf16 %v1400, %v1398
        %v1448 = vpack.c.bf16 %v1403, %v1401
        %v1449 = vpack.c.bf16 %v1404, %v1402
        %v1450 = vpack.c.bf16 %v1407, %v1405
        %v1451 = vpack.c.bf16 %v1408, %v1406
        %v1452 = vpack.c.bf16 %v1411, %v1409
        %v1453 = vpack.c.bf16 %v1412, %v1410
        %v1454 = vpack.c.bf16 %v1415, %v1413
        %v1455 = vpack.c.bf16 %v1416, %v1414
        %v1456 = vpack.c.bf16 %v1417, %v1417
        %v1457 = vpack.c.bf16 %v1418, %v1418
        %v1458 = vld [vmem:[%s4] sm:$0xff]
        %v1459 = vld [vmem:[%s4 + $0x8] sm:$0xff]
        %v1460 = vld [vmem:[%s4 + $0x10] sm:$0xff]
        %v1461 = vld [vmem:[%s4 + $0x18] sm:$0xff]
        %v1462 = vld [vmem:[%s4 + $0x20] sm:$0xff]
        %v1463 = vld [vmem:[%s4 + $0x28] sm:$0xff]
        %v1464 = vld [vmem:[%s4 + $0x30] sm:$0xff]
        %v1465 = vld [vmem:[%s4 + $0x38] sm:$0xff]
        %v1466 = vld [vmem:[%s4 + $0x40] sm:$0xff]
        %v1467 = vld [vmem:[%s4 + $0x48] sm:$0xff]
        %v1468 = vld [vmem:[%s4 + $0x50] sm:$0xff]
        %v1469 = vld [vmem:[%s4 + $0x58] sm:$0xff]
        %v1470 = vld [vmem:[%s4 + $0x60] sm:$0xf]
        %1472 = vset.pattern.permute.xlu0 0
        %1473 = vperm.xlu0 %1472, %v1458
        %v1474 = vpop.permute.xlu0 %1473
        %1477 = vset.pattern.permute.xlu0 0
        %1478 = vperm.xlu0 %1477, %v1459
        %v1479 = vpop.permute.xlu0 %1478
        %1482 = vset.pattern.permute.xlu0 0
        %1483 = vperm.xlu0 %1482, %v1460
        %v1484 = vpop.permute.xlu0 %1483
        %1487 = vset.pattern.permute.xlu0 0
        %1488 = vperm.xlu0 %1487, %v1461
        %v1489 = vpop.permute.xlu0 %1488
        %1492 = vset.pattern.permute.xlu0 0
        %1493 = vperm.xlu0 %1492, %v1462
        %v1494 = vpop.permute.xlu0 %1493
        %1497 = vset.pattern.permute.xlu0 0
        %1498 = vperm.xlu0 %1497, %v1463
        %v1499 = vpop.permute.xlu0 %1498
        %1502 = vset.pattern.permute.xlu0 0
        %1503 = vperm.xlu0 %1502, %v1464
        %v1504 = vpop.permute.xlu0 %1503
        %1507 = vset.pattern.permute.xlu0 0
        %1508 = vperm.xlu0 %1507, %v1465
        %v1509 = vpop.permute.xlu0 %1508
        %1512 = vset.pattern.permute.xlu0 0
        %1513 = vperm.xlu0 %1512, %v1466
        %v1514 = vpop.permute.xlu0 %1513
        %1517 = vset.pattern.permute.xlu0 0
        %1518 = vperm.xlu0 %1517, %v1467
        %v1519 = vpop.permute.xlu0 %1518
        %1522 = vset.pattern.permute.xlu0 0
        %1523 = vperm.xlu0 %1522, %v1468
        %v1524 = vpop.permute.xlu0 %1523
        %1527 = vset.pattern.permute.xlu0 0
        %1528 = vperm.xlu0 %1527, %v1469
        %v1529 = vpop.permute.xlu0 %1528
        %1532 = vset.pattern.permute.xlu0 0
        %1533 = vperm.xlu0 %1532, %v1470
        %v1534 = vpop.permute.xlu0 %1533
        %v1549 = vunpack.c.l.b16 %v1419
        %v1550 = vunpack.c.h.b16 %v1419
        %v1551 = vunpack.c.l.b16 %v1420
        %v1552 = vunpack.c.h.b16 %v1420
        %v1553 = vunpack.c.l.b16 %v1421
        %v1554 = vunpack.c.h.b16 %v1421
        %v1555 = vunpack.c.l.b16 %v1422
        %v1556 = vunpack.c.h.b16 %v1422
        %v1557 = vunpack.c.l.b16 %v1423
        %v1558 = vunpack.c.h.b16 %v1423
        %v1559 = vunpack.c.l.b16 %v1424
        %v1560 = vunpack.c.h.b16 %v1424
        %v1561 = vunpack.c.l.b16 %v1425
        %v1562 = vunpack.c.h.b16 %v1425
        %v1563 = vunpack.c.l.b16 %v1426
        %v1564 = vunpack.c.h.b16 %v1426
        %v1565 = vunpack.c.l.b16 %v1427
        %v1566 = vunpack.c.h.b16 %v1427
        %v1567 = vunpack.c.l.b16 %v1428
        %v1568 = vunpack.c.h.b16 %v1428
        %v1569 = vunpack.c.l.b16 %v1429
        %v1570 = vunpack.c.h.b16 %v1429
        %v1571 = vunpack.c.l.b16 %v1430
        %v1572 = vunpack.c.h.b16 %v1430
        %v1573 = vunpack.c.l.b16 %v1431
        %v1574 = vunpack.c.h.b16 %v1431
        %v1575 = vpack.c.b16 %v1551, %v1549
        %v1576 = vpack.c.b16 %v1552, %v1550
        %v1577 = vpack.c.b16 %v1555, %v1553
        %v1578 = vpack.c.b16 %v1556, %v1554
        %v1579 = vpack.c.b16 %v1559, %v1557
        %v1580 = vpack.c.b16 %v1560, %v1558
        %v1581 = vpack.c.b16 %v1563, %v1561
        %v1582 = vpack.c.b16 %v1564, %v1562
        %v1583 = vpack.c.b16 %v1567, %v1565
        %v1584 = vpack.c.b16 %v1568, %v1566
        %v1585 = vpack.c.b16 %v1571, %v1569
        %v1586 = vpack.c.b16 %v1572, %v1570
        %v1587 = vpack.c.b16 %v1573, %v1573
        %v1588 = vpack.c.b16 %v1574, %v1574
        %vm1596 = vcmask 588800
        %v1598 = vsel %vm1596, %v1576, 0
        %v1601 = vsel %vm1596, %v1578, 0
        %v1604 = vsel %vm1596, %v1580, 0
        %v1607 = vsel %vm1596, %v1582, 0
        %v1610 = vsel %vm1596, %v1584, 0
        %v1613 = vsel %vm1596, %v1586, 0
        %v1616 = vsel %vm1596, %v1588, 0
        %vm1618 = vcmask 1043456
        %v1620 = vsel %vm1618, %v1456, 0
        %v1623 = vsel %vm1618, %v1457, 0
        %1625 = vmatprep.subr.bf16.mxu0 %v1447
        %1626 = vmatpush1.bf16.msra.mxu0 %v1446
        %1627 = vmatprep.subr.bf16.mxu0 %v1445
        %1628 = vmatpush1.bf16.msra.mxu0 %v1444
        %1629 = vmatprep.subr.bf16.mxu0 %v1443
        %1630 = vmatpush1.bf16.msra.mxu0 %v1442
        %1631 = vmatprep.subr.bf16.mxu0 %v1441
        %1632 = vmatpush1.bf16.msra.mxu0 %v1440
        %1633 = vmatprep.subr.bf16.mxu0 %v1439
        %1634 = vmatpush1.bf16.msra.mxu0 %v1438
        %1635 = vmatprep.subr.bf16.mxu0 %v1437
        %1636 = vmatpush1.bf16.msra.mxu0 %v1436
        %1637 = vmatprep.subr.bf16.mxu0 %v1435
        %1638 = vmatpush1.bf16.msra.mxu0 %v1434
        %1639 = vmatprep.subr.bf16.mxu0 %v1433
        %1640 = vmatpush1.bf16.msra.mxu0 %v1432
        %1641 = vmatprep.subr.bf16.mxu0 0
        %1642 = vmatpush2.bf16.msra.mxu0 0
        %1643 = vmatprep.subr.bf16.mxu0 0
        %1644 = vmatpush2.bf16.msra.mxu0 0
        %1645 = vmatprep.subr.bf16.mxu0 0
        %1646 = vmatpush2.bf16.msra.mxu0 0
        %1647 = vmatprep.subr.bf16.mxu0 %v1623
        %1648 = vmatpush2.bf16.msra.mxu0 %v1620
        %1649 = vmatprep.subr.bf16.mxu0 %v1455
        %1650 = vmatpush2.bf16.msra.mxu0 %v1454
        %1651 = vmatprep.subr.bf16.mxu0 %v1453
        %1652 = vmatpush2.bf16.msra.mxu0 %v1452
        %1653 = vmatprep.subr.bf16.mxu0 %v1451
        %1654 = vmatpush2.bf16.msra.mxu0 %v1450
        %1655 = vmatprep.subr.bf16.mxu0 %v1449
        %1656 = vmatpush2.bf16.msra.mxu0 %v1448
        %1657 = vmatprep.mubr.bf16.mxu0 %v1598
        %1658 = vmatmul.mubr.bf16.gmra.mxu0 %v1575
        %v1659 = vpop.f32.mrf.mxu0
        %v1660 = vadd.f32 %v1474, %v1659
        %v1661 = vpop.f32.mrf.mxu0
        %v1662 = vadd.f32 %v1474, %v1661
        %v1663 = vpop.f32.mrf.mxu0
        %v1664 = vadd.f32 %v1479, %v1663
        %v1665 = vpop.f32.mrf.mxu0
        %v1666 = vadd.f32 %v1479, %v1665
        %1667 = vmatprep.mubr.bf16.mxu0 %v1601
        %1668 = vmatmul.mubr.bf16.gmra.mxu0 %v1577
        %v1669 = vpop.f32.mrf.mxu0
        %v1670 = vadd.f32 %v1484, %v1669
        %v1671 = vpop.f32.mrf.mxu0
        %v1672 = vadd.f32 %v1484, %v1671
        %v1673 = vpop.f32.mrf.mxu0
        %v1674 = vadd.f32 %v1489, %v1673
        %v1675 = vpop.f32.mrf.mxu0
        %v1676 = vadd.f32 %v1489, %v1675
        %1677 = vmatprep.mubr.bf16.mxu0 %v1604
        %1678 = vmatmul.mubr.bf16.gmra.mxu0 %v1579
        %v1679 = vpop.f32.mrf.mxu0
        %v1680 = vadd.f32 %v1494, %v1679
        %v1681 = vpop.f32.mrf.mxu0
        %v1682 = vadd.f32 %v1494, %v1681
        %v1683 = vpop.f32.mrf.mxu0
        %v1684 = vadd.f32 %v1499, %v1683
        %v1685 = vpop.f32.mrf.mxu0
        %v1686 = vadd.f32 %v1499, %v1685
        %1687 = vmatprep.mubr.bf16.mxu0 %v1607
        %1688 = vmatmul.mubr.bf16.gmra.mxu0 %v1581
        %v1689 = vpop.f32.mrf.mxu0
        %v1690 = vadd.f32 %v1504, %v1689
        %v1691 = vpop.f32.mrf.mxu0
        %v1692 = vadd.f32 %v1504, %v1691
        %v1693 = vpop.f32.mrf.mxu0
        %v1694 = vadd.f32 %v1509, %v1693
        %v1695 = vpop.f32.mrf.mxu0
        %v1696 = vadd.f32 %v1509, %v1695
        %1697 = vmatprep.mubr.bf16.mxu0 %v1610
        %1698 = vmatmul.mubr.bf16.gmra.mxu0 %v1583
        %v1699 = vpop.f32.mrf.mxu0
        %v1700 = vadd.f32 %v1514, %v1699
        %v1701 = vpop.f32.mrf.mxu0
        %v1702 = vadd.f32 %v1514, %v1701
        %v1703 = vpop.f32.mrf.mxu0
        %v1704 = vadd.f32 %v1519, %v1703
        %v1705 = vpop.f32.mrf.mxu0
        %v1706 = vadd.f32 %v1519, %v1705
        %1707 = vmatprep.mubr.bf16.mxu0 %v1613
        %1708 = vmatmul.mubr.bf16.gmra.mxu0 %v1585
        %v1709 = vpop.f32.mrf.mxu0
        %v1710 = vadd.f32 %v1524, %v1709
        %v1711 = vpop.f32.mrf.mxu0
        %v1712 = vadd.f32 %v1524, %v1711
        %v1713 = vpop.f32.mrf.mxu0
        %v1714 = vadd.f32 %v1529, %v1713
        %v1715 = vpop.f32.mrf.mxu0
        %v1716 = vadd.f32 %v1529, %v1715
        %1717 = vmatprep.mubr.bf16.mxu0 %v1616
        %1718 = vmatmul.mubr.bf16.gmra.mxu0 %v1587
        %v1719 = vpop.f32.mrf.mxu0
        %v1720 = vadd.f32 %v1534, %v1719
        %v1721 = vpop.f32.mrf.mxu0
        %v1722 = vadd.f32 %v1534, %v1721
        %v1723 = vpop.f32.mrf.mxu0
        %v1724 = vpop.f32.mrf.mxu0
        %1725 = vdwg.mxu0
        %v1726 = vmax.f32 %v1660, 0.0
        %v1727 = vmax.f32 %v1662, 0.0
        %v1728 = vmax.f32 %v1664, 0.0
        %v1729 = vmax.f32 %v1666, 0.0
        %v1730 = vmax.f32 %v1670, 0.0
        %v1731 = vmax.f32 %v1672, 0.0
        %v1732 = vmax.f32 %v1674, 0.0
        %v1733 = vmax.f32 %v1676, 0.0
        %v1734 = vmax.f32 %v1680, 0.0
        %v1735 = vmax.f32 %v1682, 0.0
        %v1736 = vmax.f32 %v1684, 0.0
        %v1737 = vmax.f32 %v1686, 0.0
        %v1738 = vmax.f32 %v1690, 0.0
        %v1739 = vmax.f32 %v1692, 0.0
        %v1740 = vmax.f32 %v1694, 0.0
        %v1741 = vmax.f32 %v1696, 0.0
        %v1742 = vmax.f32 %v1700, 0.0
        %v1743 = vmax.f32 %v1702, 0.0
        %v1744 = vmax.f32 %v1704, 0.0
        %v1745 = vmax.f32 %v1706, 0.0
        %v1746 = vmax.f32 %v1710, 0.0
        %v1747 = vmax.f32 %v1712, 0.0
        %v1748 = vmax.f32 %v1714, 0.0
        %v1749 = vmax.f32 %v1716, 0.0
        %v1750 = vmax.f32 %v1720, 0.0
        %v1751 = vmax.f32 %v1722, 0.0
        %v1752 = vld [vmem:[%s5] sm:$0xf]
        %v1753 = vld [vmem:[%s5 + $0x4] sm:$0xf]
        %v1754 = vld [vmem:[%s5 + $0x8] sm:$0xf]
        %v1755 = vld [vmem:[%s5 + $0xc] sm:$0xf]
        %v1756 = vld [vmem:[%s5 + $0x10] sm:$0xf]
        %v1757 = vld [vmem:[%s5 + $0x14] sm:$0xf]
        %v1758 = vld [vmem:[%s5 + $0x18] sm:$0x1]
        %v1759 = vpack.c.bf16 %v1728, %v1726
        %v1760 = vpack.c.bf16 %v1729, %v1727
        %v1761 = vpack.c.bf16 %v1732, %v1730
        %v1762 = vpack.c.bf16 %v1733, %v1731
        %v1763 = vpack.c.bf16 %v1736, %v1734
        %v1764 = vpack.c.bf16 %v1737, %v1735
        %v1765 = vpack.c.bf16 %v1740, %v1738
        %v1766 = vpack.c.bf16 %v1741, %v1739
        %v1767 = vpack.c.bf16 %v1744, %v1742
        %v1768 = vpack.c.bf16 %v1745, %v1743
        %v1769 = vpack.c.bf16 %v1748, %v1746
        %v1770 = vpack.c.bf16 %v1749, %v1747
        %v1771 = vpack.c.bf16 %v1750, %v1750
        %v1772 = vpack.c.bf16 %v1751, %v1751
        %v1773 = vld [vmem:[%s6] sm:$0xff]
        %v1774 = vld [vmem:[%s6 + $0x8] sm:$0xff]
        %v1775 = vld [vmem:[%s6 + $0x10] sm:$0xff]
        %v1776 = vld [vmem:[%s6 + $0x18] sm:$0xff]
        %v1777 = vld [vmem:[%s6 + $0x20] sm:$0xff]
        %v1778 = vld [vmem:[%s6 + $0x28] sm:$0xff]
        %v1779 = vld [vmem:[%s6 + $0x30] sm:$0x3]
        %1781 = vset.pattern.permute.xlu0 0
        %1782 = vperm.xlu0 %1781, %v1773
        %v1783 = vpop.permute.xlu0 %1782
        %1786 = vset.pattern.permute.xlu0 0
        %1787 = vperm.xlu0 %1786, %v1774
        %v1788 = vpop.permute.xlu0 %1787
        %1791 = vset.pattern.permute.xlu0 0
        %1792 = vperm.xlu0 %1791, %v1775
        %v1793 = vpop.permute.xlu0 %1792
        %1796 = vset.pattern.permute.xlu0 0
        %1797 = vperm.xlu0 %1796, %v1776
        %v1798 = vpop.permute.xlu0 %1797
        %1801 = vset.pattern.permute.xlu0 0
        %1802 = vperm.xlu0 %1801, %v1777
        %v1803 = vpop.permute.xlu0 %1802
        %1806 = vset.pattern.permute.xlu0 0
        %1807 = vperm.xlu0 %1806, %v1778
        %v1808 = vpop.permute.xlu0 %1807
        %1811 = vset.pattern.permute.xlu0 0
        %1812 = vperm.xlu0 %1811, %v1779
        %v1813 = vpop.permute.xlu0 %1812
        %v1822 = vunpack.c.l.b16 %v1752
        %v1823 = vunpack.c.l.b16 %v1753
        %v1824 = vunpack.c.l.b16 %v1754
        %v1825 = vunpack.c.l.b16 %v1755
        %v1826 = vunpack.c.l.b16 %v1756
        %v1827 = vunpack.c.l.b16 %v1757
        %v1828 = vunpack.c.l.b16 %v1758
        %v1829 = vpack.c.b16 %v1823, %v1822
        %v1830 = vpack.c.b16 %v1825, %v1824
        %v1831 = vpack.c.b16 %v1827, %v1826
        %v1832 = vpack.c.b16 %v1828, %v1828
        %vm1833 = vcmask 818176
        %v1835 = vsel %vm1833, %v1829, 0
        %v1838 = vsel %vm1833, %v1830, 0
        %v1841 = vsel %vm1833, %v1831, 0
        %v1844 = vsel %vm1833, %v1832, 0
        %vm1846 = vcmask 1041408
        %v1848 = vsel %vm1846, %v1771, 0
        %v1851 = vsel %vm1846, %v1772, 0
        %1853 = vmatprep.subr.bf16.mxu0 0
        %1854 = vmatpush1.bf16.msra.mxu0 0
        %1855 = vmatprep.subr.bf16.mxu0 %v1851
        %1856 = vmatpush1.bf16.msra.mxu0 %v1848
        %1857 = vmatprep.subr.bf16.mxu0 %v1770
        %1858 = vmatpush1.bf16.msra.mxu0 %v1769
        %1859 = vmatprep.subr.bf16.mxu0 %v1768
        %1860 = vmatpush1.bf16.msra.mxu0 %v1767
        %1861 = vmatprep.subr.bf16.mxu0 %v1766
        %1862 = vmatpush1.bf16.msra.mxu0 %v1765
        %1863 = vmatprep.subr.bf16.mxu0 %v1764
        %1864 = vmatpush1.bf16.msra.mxu0 %v1763
        %1865 = vmatprep.subr.bf16.mxu0 %v1762
        %1866 = vmatpush1.bf16.msra.mxu0 %v1761
        %1867 = vmatprep.subr.bf16.mxu0 %v1760
        %1868 = vmatpush1.bf16.msra.mxu0 %v1759
        %1869 = vmatprep.subr.bf16.mxu0 0
        %1870 = vmatpush2.bf16.msra.mxu0 0
        %1871 = vmatprep.subr.bf16.mxu0 0
        %1872 = vmatpush2.bf16.msra.mxu0 0
        %1873 = vmatprep.subr.bf16.mxu0 0
        %1874 = vmatpush2.bf16.msra.mxu0 0
        %1875 = vmatprep.subr.bf16.mxu0 0
        %1876 = vmatpush2.bf16.msra.mxu0 0
        %1877 = vmatprep.subr.bf16.mxu0 0
        %1878 = vmatpush2.bf16.msra.mxu0 0
        %1879 = vmatprep.subr.bf16.mxu0 0
        %1880 = vmatpush2.bf16.msra.mxu0 0
        %1881 = vmatprep.subr.bf16.mxu0 0
        %1882 = vmatpush2.bf16.msra.mxu0 0
        %1883 = vmatprep.subr.bf16.mxu0 0
        %1884 = vmatpush2.bf16.msra.mxu0 0
        %1885 = vmatprep.mubr.bf16.mxu0 0
        %1886 = vmatmul.mubr.bf16.gmra.mxu0 %v1835
        %v1887 = vpop.f32.mrf.mxu0
        %v1888 = vadd.f32 %v1783, %v1887
        %v1889 = vpop.f32.mrf.mxu0
        %v1890 = vadd.f32 %v1783, %v1889
        %v1891 = vpop.f32.mrf.mxu0
        %v1892 = vadd.f32 %v1788, %v1891
        %v1893 = vpop.f32.mrf.mxu0
        %v1894 = vadd.f32 %v1788, %v1893
        %1895 = vmatprep.mubr.bf16.mxu0 0
        %1896 = vmatmul.mubr.bf16.gmra.mxu0 %v1838
        %v1897 = vpop.f32.mrf.mxu0
        %v1898 = vadd.f32 %v1793, %v1897
        %v1899 = vpop.f32.mrf.mxu0
        %v1900 = vadd.f32 %v1793, %v1899
        %v1901 = vpop.f32.mrf.mxu0
        %v1902 = vadd.f32 %v1798, %v1901
        %v1903 = vpop.f32.mrf.mxu0
        %v1904 = vadd.f32 %v1798, %v1903
        %1905 = vmatprep.mubr.bf16.mxu0 0
        %1906 = vmatmul.mubr.bf16.gmra.mxu0 %v1841
        %v1907 = vpop.f32.mrf.mxu0
        %v1908 = vadd.f32 %v1803, %v1907
        %v1909 = vpop.f32.mrf.mxu0
        %v1910 = vadd.f32 %v1803, %v1909
        %v1911 = vpop.f32.mrf.mxu0
        %v1912 = vadd.f32 %v1808, %v1911
        %v1913 = vpop.f32.mrf.mxu0
        %v1914 = vadd.f32 %v1808, %v1913
        %1915 = vmatprep.mubr.bf16.mxu0 0
        %1916 = vmatmul.mubr.bf16.gmra.mxu0 %v1844
        %v1917 = vpop.f32.mrf.mxu0
        %v1918 = vadd.f32 %v1813, %v1917
        %v1919 = vpop.f32.mrf.mxu0
        %v1920 = vadd.f32 %v1813, %v1919
        %v1921 = vpop.f32.mrf.mxu0
        %v1922 = vpop.f32.mrf.mxu0
        %1923 = vdwg.mxu0
        %v1924 = vmax.f32 %v1888, 0.0
        %v1925 = vmax.f32 %v1890, 0.0
        %v1926 = vmax.f32 %v1892, 0.0
        %v1927 = vmax.f32 %v1894, 0.0
        %v1928 = vmax.f32 %v1898, 0.0
        %v1929 = vmax.f32 %v1900, 0.0
        %v1930 = vmax.f32 %v1902, 0.0
        %v1931 = vmax.f32 %v1904, 0.0
        %v1932 = vmax.f32 %v1908, 0.0
        %v1933 = vmax.f32 %v1910, 0.0
        %v1934 = vmax.f32 %v1912, 0.0
        %v1935 = vmax.f32 %v1914, 0.0
        %v1936 = vmax.f32 %v1918, 0.0
        %v1937 = vmax.f32 %v1920, 0.0
        %v1938 = vld [vmem:[%s7] sm:$0xff]
        %v1939 = vld [vmem:[%s7 + $0x8] sm:$0xff]
        %v1940 = vld [vmem:[%s7 + $0x10] sm:$0xff]
        %v1941 = vld [vmem:[%s7 + $0x18] sm:$0xff]
        %v1942 = vld [vmem:[%s7 + $0x20] sm:$0xff]
        %v1943 = vld [vmem:[%s7 + $0x28] sm:$0xff]
        %v1944 = vld [vmem:[%s7 + $0x30] sm:$0x3]
        %1946 = vset.pattern.permute.xlu0 0
        %1947 = vperm.xlu0 %1946, %v1938
        %v1948 = vpop.permute.xlu0 %1947
        %1951 = vset.pattern.permute.xlu0 0
        %1952 = vperm.xlu0 %1951, %v1939
        %v1953 = vpop.permute.xlu0 %1952
        %1956 = vset.pattern.permute.xlu0 0
        %1957 = vperm.xlu0 %1956, %v1940
        %v1958 = vpop.permute.xlu0 %1957
        %1961 = vset.pattern.permute.xlu0 0
        %1962 = vperm.xlu0 %1961, %v1941
        %v1963 = vpop.permute.xlu0 %1962
        %1966 = vset.pattern.permute.xlu0 0
        %1967 = vperm.xlu0 %1966, %v1942
        %v1968 = vpop.permute.xlu0 %1967
        %1971 = vset.pattern.permute.xlu0 0
        %1972 = vperm.xlu0 %1971, %v1943
        %v1973 = vpop.permute.xlu0 %1972
        %1976 = vset.pattern.permute.xlu0 0
        %1977 = vperm.xlu0 %1976, %v1944
        %v1978 = vpop.permute.xlu0 %1977
        %v1980 = vmul.f32 %v1924, %v1948
        %v1981 = vmul.f32 %v1925, %v1948
        %v1982 = vmul.f32 %v1926, %v1953
        %v1983 = vmul.f32 %v1927, %v1953
        %v1984 = vmul.f32 %v1928, %v1958
        %v1985 = vmul.f32 %v1929, %v1958
        %v1986 = vmul.f32 %v1930, %v1963
        %v1987 = vmul.f32 %v1931, %v1963
        %v1988 = vmul.f32 %v1932, %v1968
        %v1989 = vmul.f32 %v1933, %v1968
        %v1990 = vmul.f32 %v1934, %v1973
        %v1991 = vmul.f32 %v1935, %v1973
        %v1992 = vmul.f32 %v1936, %v1978
        %v1993 = vmul.f32 %v1937, %v1978
        %v1994 = vadd.f32 %v1980, %v1982
        %v1995 = vadd.f32 %v1994, %v1984
        %v1996 = vadd.f32 %v1995, %v1986
        %v1997 = vadd.f32 %v1996, %v1988
        %v1998 = vadd.f32 %v1997, %v1990
        %v1999 = vsel %vm1846, %v1992, 0.0
        %v2000 = vadd.f32 %v1998, %v1999
        %v2001 = vrot.slane %v2000, 4
        %v2002 = vadd.f32 %v2000, %v2001
        %v2003 = vrot.slane %v2002, 2
        %v2004 = vadd.f32 %v2002, %v2003
        %v2005 = vrot.slane %v2004, 1
        %v2006 = vadd.f32 %v2004, %v2005
        %v2007 = vadd.f32 %v1981, %v1983
        %v2008 = vadd.f32 %v2007, %v1985
        %v2009 = vadd.f32 %v2008, %v1987
        %v2010 = vadd.f32 %v2009, %v1989
        %v2011 = vadd.f32 %v2010, %v1991
        %v2012 = vsel %vm1846, %v1993, 0.0
        %v2013 = vadd.f32 %v2011, %v2012
        %v2014 = vrot.slane %v2013, 4
        %v2015 = vadd.f32 %v2013, %v2014
        %v2016 = vrot.slane %v2015, 2
        %v2017 = vadd.f32 %v2015, %v2016
        %v2018 = vrot.slane %v2017, 1
        %v2019 = vadd.f32 %v2017, %v2018
        %v2020 = vld [vmem:[#allocation2] sm:$0x1]
        %2022 = vset.pattern.permute.xlu0 0
        %2023 = vperm.xlu0 %2022, %v2020
        %v2024 = vpop.permute.xlu0 %2023
        %v2026 = vlaneseq
        %v2027 = vshrl.u32 %v2026, 7
        %v2028 = vsub.s32 0, %v2027
        %v2029 = vrot.slane %v2024, %v2028
        %v2030 = vadd.f32 %v2006, %v2029
        %v2031 = vadd.f32 %v2019, %v2029
        %v2034 = vcombine.low %v2030, %v2031
        %v2036 = vunpack.c.l.s4 1966171168
        %v2037 = vunpack.c.0.s8 %v2036
        %v2038 = vlaneseq
        %v2039 = vshrl.u32 %v2038, 7
        %v2040 = vsub.s32 %v2037, %v2039
        %v2041 = vrot.slane %v2034, %v2040
        %v2043 = vunpack.c.l.s4 1966171168
        %v2044 = vunpack.c.0.s8 %v2043
        %v2045 = vlaneseq
        %v2046 = vshrl.u32 %v2045, 7
        %v2047 = vsub.s32 %v2044, %v2046
        %v2048 = vrot.slane %v2041, %v2047
        %v2050 = vlaneseq
        %vm2051 = vcmp.ge.s32.totalorder %v2050, 0
        %vm2052 = vcmp.lt.s32.totalorder %v2050, 256
        %vm2053 = vmand %vm2051, %vm2052
        %2054 = vst.msk [vmem:[%s352] sm:$0x3] %vm2053, %v2048
        %s2055 = sand.u32 %s230, 1
        %s2056 = scalar_lea.sflag [#allocation5], %s2055
        %s2057 = sand.u32 %s230, 1
        %s2058 = smul.addr %s2057, 2
        %s2059 = scalar_lea.vmem [#allocation6], %s2058
        // Predicated region
        $region61: #{tpu_custom_call.1} parent=55 // pred_check
          %p2060 = pneg %p240
        $region62: #{tpu_custom_call.1} parent=55 // pred_check_branch
          %2062 = sbr.rel (%p2060) target = $region64
        $region63: #{tpu_custom_call.1} parent=55 // pred_region
          %s2063 = smul.u32 2, %s28
          %s2065 = ssub.s32 32, 32
          %2066 = vsyncadd %s2056, %s2065
          %s2067 = smul.addr %s2063, 16
          %s2068 = scalar_lea.hbm %s9, %s2067
          %s2070 = sshll.u32 %s2059, 4
          %s2071 = int_to_ptr.vmem [resolvable:$true] %s2070
          %2073 = dma.vmem_to_hbm [thread:$0]  %s2071, 32, %s2068, %s2056
        $region64: #{tpu_custom_call.1} parent=55 // pred_fallthru
          _
      $region56: #{tpu_custom_call.1} parent=5 // pred_fallthru
        _
      %p2074 = scmp.le.s32.totalorder 2, %s23
      // Predicated region
      $region65: #{tpu_custom_call.1} parent=5 // pred_check
        %p2075 = pneg %p2074
      $region66: #{tpu_custom_call.1} parent=5 // pred_check_branch
        %2077 = sbr.rel (%p2075) target = $region68
      $region67: #{tpu_custom_call.1} parent=5 // pred_region
        %s2078 = ssub.s32 %s23, 2
        // Predicated region
        $region69: #{tpu_custom_call.1} parent=67 // pred_check
          %p2079 = pneg %p246
        $region70: #{tpu_custom_call.1} parent=67 // pred_check_branch
          %2081 = sbr.rel (%p2079) target = $region72
        $region71: #{tpu_custom_call.1} parent=67 // pred_region
          %s2082 = sand.u32 %s231, 1
          %s2083 = scalar_lea.sflag [#allocation5], %s2082
          %s2084 = sand.u32 %s231, 1
          %s2085 = smul.addr %s2084, 2
          %s2086 = scalar_lea.vmem [#allocation6], %s2085
          %2087 = dma.done %s2083, 32
        $region72: #{tpu_custom_call.1} parent=67 // pred_fallthru
          _
      $region68: #{tpu_custom_call.1} parent=5 // pred_fallthru
        _
    $region6: #{tpu_custom_call.1} parent=1 // loop_footer
      %s27 = sadd.s32 1, %s23
    $region7: #{tpu_custom_call.1} parent=1 // loop_footer_branch
      %22 = sbr.rel target = $region3
    $region8: #{tpu_custom_call.1} parent=1 // loop_exit
      _
    %2088 = vsyncpa [#allocation4], 1
    %s2089 = scalar_lea.sflag [#allocation4], 1
    %2090 = vsyncpa %s2089, 1
    %2091 = vsyncpa [#allocation5], 1
    %s2092 = scalar_lea.sflag [#allocation5], 1
    %2093 = vsyncpa %s2092, 1

</llo_original>
